<compile_context>
chip_gen: v7x
topology: tpu7x:2x2x1
jax: 0.10.0
libtpu: 0.0.40
codegen_flags: <defaults>
</compile_context>

<pallas_src>
import functools

import jax
import jax.numpy as jnp
from jax.experimental import pallas as pl
from jax.experimental.pallas import tpu as pltpu


STATE_SIZE = 37
ACTION_SIZE = 4
FC1_UNITS = 16
FC2_UNITS = 8

# Default batch tile. 2048 rows -> x block ~300 KiB f32 (x2 buffers) plus tiny
# f32 temps: comfortably inside the scoped-VMEM budget on v5e/v6e (128 MiB)
# and v7x (64 MiB). Multiple of 8 keeps sublane loads/stores unmasked.
DEFAULT_TILE_B = 2048


def _round_up(n, m):
    return ((n + m - 1) // m) * m


def qnetwork_kernel(x_ref, w1_ref, b1_ref, w2_ref, b2_ref, wh_ref, bh_ref,
                    out_ref):
    """One batch tile: fc1+relu -> fc2+relu -> fused heads -> dueling combine."""
    dot = functools.partial(jnp.dot,
                            preferred_element_type=jnp.float32,
                            precision=jax.lax.Precision.HIGHEST)
    cdt = x_ref.dtype  # compute dtype for MXU inputs (f32 or bf16)

    x = x_ref[...]
    # fc1 + relu  (post-dot math always in f32; biases are f32)
    h1 = jnp.maximum(dot(x, w1_ref[...]) + b1_ref[...], 0.0)
    # fc2 + relu
    h2 = jnp.maximum(dot(h1.astype(cdt), w2_ref[...]) + b2_ref[...], 0.0)
    # fused advantage + state-value heads: (TILE_B, ACTION_SIZE + 1)
    heads = dot(h2.astype(cdt), wh_ref[...]) + bh_ref[...]
    adv = heads[:, :ACTION_SIZE]
    val = heads[:, ACTION_SIZE:ACTION_SIZE + 1]   # broadcasts like .expand
    # dueling combine: adv + val - mean(adv, axis=1, keepdims=True)
    out_ref[...] = (adv + val
                    - jnp.mean(adv, axis=1, keepdims=True)).astype(out_ref.dtype)


def qnetwork_forward(x, params, *, tile_b=DEFAULT_TILE_B, compute_dtype=None):
    """Dueling-DQN forward.

    compute_dtype: None keeps everything f32; jnp.bfloat16 halves the dominant
    x HBM stream (biggest relative win on v5e) while biases / post-dot math /
    the output stay f32.
    """
    (w1, b1, w2, b2, wa, ba, ws, bs) = params
    B = x.shape[0]

    # Fuse the two heads into a single matmul.
    wh = jnp.concatenate([wa, ws], axis=1)   # (FC2_UNITS, ACTION_SIZE + 1)
    bh = jnp.concatenate([ba, bs], axis=1)   # (1, ACTION_SIZE + 1)

    if compute_dtype is not None:
        x = x.astype(compute_dtype)
        w1 = w1.astype(compute_dtype)
        w2 = w2.astype(compute_dtype)
        wh = wh.astype(compute_dtype)
    # biases stay f32 (added after the f32-accumulated dot)

    # Pick a batch tile: multiple of 8, no larger than needed, capped by tile_b.
    tb = max(8, min(tile_b, _round_up(B, 8)))
    padded_b = _round_up(B, tb)
    if padded_b != B:
        x = jnp.pad(x, ((0, padded_b - B), (0, 0)))
    grid = (padded_b // tb,)

    # Weights/biases: full-array blocks with a constant index_map -> stay
    # resident in VMEM across every grid step.
    def const_spec(arr):
        return pl.BlockSpec(arr.shape, lambda i: (0,) * arr.ndim)

    out = pl.pallas_call(
        qnetwork_kernel,
        out_shape=jax.ShapeDtypeStruct((padded_b, ACTION_SIZE), jnp.float32),
        grid=grid,
        in_specs=[
            pl.BlockSpec((tb, STATE_SIZE), lambda i: (i, 0)),   # x: batch-tiled
            const_spec(w1), const_spec(b1),
            const_spec(w2), const_spec(b2),
            const_spec(wh), const_spec(bh),
        ],
        out_specs=pl.BlockSpec((tb, ACTION_SIZE), lambda i: (i, 0)),
        compiler_params=pltpu.CompilerParams(
            dimension_semantics=("parallel",),   # megacore sharding on v7x
        ),
    )(x, w1, b1, w2, b2, wh, bh)

    return out[:B]


def init_params(key):
    """Deterministic init mimicking nn.Linear default (uniform +/- 1/sqrt(fan_in)).

    Weights stored as (in_features, out_features); biases as (1, out_features)."""
    def linear(key, fan_in, fan_out):
        kw, kb = jax.random.split(key)
        bound = 1.0 / jnp.sqrt(jnp.float32(fan_in))
        w = jax.random.uniform(kw, (fan_in, fan_out), jnp.float32, -bound, bound)
        b = jax.random.uniform(kb, (1, fan_out), jnp.float32, -bound, bound)
        return w, b

    k1, k2, k3, k4 = jax.random.split(key, 4)
    w1, b1 = linear(k1, STATE_SIZE, FC1_UNITS)
    w2, b2 = linear(k2, FC1_UNITS, FC2_UNITS)
    wa, ba = linear(k3, FC2_UNITS, ACTION_SIZE)
    ws, bs = linear(k4, FC2_UNITS, 1)
    return (w1, b1, w2, b2, wa, ba, ws, bs)


def qnetwork_ref(x, params):
    """Pure-JAX reference matching the PyTorch forward exactly."""
    (w1, b1, w2, b2, wa, ba, ws, bs) = params
    h1 = jnp.maximum(x @ w1 + b1, 0.0)
    h2 = jnp.maximum(h1 @ w2 + b2, 0.0)
    adv = h2 @ wa + ba
    val = h2 @ ws + bs            # (B, 1), broadcasts like .expand(-1, A)
    return adv + val - jnp.mean(adv, axis=1, keepdims=True)


if __name__ == "__main__":
    key = jax.random.PRNGKey(0)
    k_params, k_x1, k_x2 = jax.random.split(key, 3)
    params = init_params(k_params)

    # --- small aligned batch, f32 path --------------------------------------
    batch = 8
    x = jax.random.normal(k_x1, (batch, STATE_SIZE), jnp.float32)
    out = jax.block_until_ready(qnetwork_forward(x, params))
    ref = qnetwork_ref(x, params)
    assert out.shape == (batch, ACTION_SIZE)
    assert jnp.allclose(out, ref, atol=1e-5, rtol=1e-5), "mismatch vs reference (f32)"

    # --- batch not divisible by the tile, multi-step grid (tests padding +
    #     weight residency across grid steps) --------------------------------
    batch2 = 20
    x2 = jax.random.normal(k_x2, (batch2, STATE_SIZE), jnp.float32)
    out2 = jax.block_until_ready(qnetwork_forward(x2, params, tile_b=8))
    ref2 = qnetwork_ref(x2, params)
    assert out2.shape == (batch2, ACTION_SIZE)
    assert jnp.allclose(out2, ref2, atol=1e-5, rtol=1e-5), "mismatch vs reference (padded/grid)"

    # --- bf16 compute path (halved x/weight HBM traffic), looser tolerance ---
    out_bf16 = jax.block_until_ready(
        qnetwork_forward(x2, params, tile_b=8, compute_dtype=jnp.bfloat16))
    assert out_bf16.shape == (batch2, ACTION_SIZE)
    assert jnp.allclose(out_bf16, ref2, atol=5e-2, rtol=5e-2), "mismatch vs reference (bf16)"

    print("KERNEL_OK")
</pallas_src>

<mosaic_0001>
module attributes {stable_mosaic.version = 11 : i64} {
  func.func @qnetwork_kernel(%arg0: i32, %arg1: memref<8x37xf32, #tpu.memory_space<vmem>>, %arg2: memref<37x16xf32, #tpu.memory_space<vmem>>, %arg3: memref<1x16xf32, #tpu.memory_space<vmem>>, %arg4: memref<16x8xf32, #tpu.memory_space<vmem>>, %arg5: memref<1x8xf32, #tpu.memory_space<vmem>>, %arg6: memref<8x5xf32, #tpu.memory_space<vmem>>, %arg7: memref<1x5xf32, #tpu.memory_space<vmem>>, %arg8: memref<8x4xf32, #tpu.memory_space<vmem>>) attributes {dimension_semantics = [#tpu.dimension_semantics<parallel>], iteration_bounds = array<i64: 1>, scalar_prefetch = 0 : i64, scratch_operands = 0 : i64, tpu.core_type = #tpu.core_type<tc>, window_params = [{transform_indices = @transform_0, window_bounds = array<i64: 8, 37>}, {pipeline_mode = #tpu.pipeline_mode<synchronous>, transform_indices = @transform_1, window_bounds = array<i64: 37, 16>}, {pipeline_mode = #tpu.pipeline_mode<synchronous>, transform_indices = @transform_2, window_bounds = array<i64: 1, 16>}, {pipeline_mode = #tpu.pipeline_mode<synchronous>, transform_indices = @transform_3, window_bounds = array<i64: 16, 8>}, {pipeline_mode = #tpu.pipeline_mode<synchronous>, transform_indices = @transform_4, window_bounds = array<i64: 1, 8>}, {pipeline_mode = #tpu.pipeline_mode<synchronous>, transform_indices = @transform_5, window_bounds = array<i64: 8, 5>}, {pipeline_mode = #tpu.pipeline_mode<synchronous>, transform_indices = @transform_6, window_bounds = array<i64: 1, 5>}, {transform_indices = @transform_7, window_bounds = array<i64: 8, 4>}]} {
    %c0 = arith.constant 0 : index
    %c0_0 = arith.constant 0 : index
    %0 = vector.load %arg1[%c0, %c0_0] : memref<8x37xf32, #tpu.memory_space<vmem>>, vector<8x37xf32>
    %c0_1 = arith.constant 0 : index
    %c0_2 = arith.constant 0 : index
    %1 = vector.load %arg2[%c0_1, %c0_2] : memref<37x16xf32, #tpu.memory_space<vmem>>, vector<37x16xf32>
    %cst = arith.constant dense<0.000000e+00> : vector<8x16xf32>
    %2 = tpu.matmul %0, %1, %cst {dimension_numbers = #tpu.dot_dimension_numbers<[1], [0], [0], [1], [0, 0, 1, 1], [], []>, precision = #tpu.contract_precision<fp32>} : vector<8x37xf32>, vector<37x16xf32>, vector<8x16xf32> -> vector<8x16xf32>
    %c0_3 = arith.constant 0 : index
    %c0_4 = arith.constant 0 : index
    %3 = vector.load %arg3[%c0_3, %c0_4] : memref<1x16xf32, #tpu.memory_space<vmem>>, vector<1x16xf32>
    %4 = vector.broadcast %3 : vector<1x16xf32> to vector<8x16xf32>
    %5 = arith.addf %2, %4 : vector<8x16xf32>
    %cst_5 = arith.constant 0.000000e+00 : f32
    %6 = vector.broadcast %cst_5 : f32 to vector<8x16xf32>
    %7 = arith.maximumf %5, %6 : vector<8x16xf32>
    %c0_6 = arith.constant 0 : index
    %c0_7 = arith.constant 0 : index
    %8 = vector.load %arg4[%c0_6, %c0_7] : memref<16x8xf32, #tpu.memory_space<vmem>>, vector<16x8xf32>
    %cst_8 = arith.constant dense<0.000000e+00> : vector<8x8xf32>
    %9 = tpu.matmul %7, %8, %cst_8 {dimension_numbers = #tpu.dot_dimension_numbers<[1], [0], [0], [1], [0, 0, 1, 1], [], []>, precision = #tpu.contract_precision<fp32>} : vector<8x16xf32>, vector<16x8xf32>, vector<8x8xf32> -> vector<8x8xf32>
    %c0_9 = arith.constant 0 : index
    %c0_10 = arith.constant 0 : index
    %10 = vector.load %arg5[%c0_9, %c0_10] : memref<1x8xf32, #tpu.memory_space<vmem>>, vector<1x8xf32>
    %11 = vector.broadcast %10 : vector<1x8xf32> to vector<8x8xf32>
    %12 = arith.addf %9, %11 : vector<8x8xf32>
    %cst_11 = arith.constant 0.000000e+00 : f32
    %13 = vector.broadcast %cst_11 : f32 to vector<8x8xf32>
    %14 = arith.maximumf %12, %13 : vector<8x8xf32>
    %c0_12 = arith.constant 0 : index
    %c0_13 = arith.constant 0 : index
    %15 = vector.load %arg6[%c0_12, %c0_13] : memref<8x5xf32, #tpu.memory_space<vmem>>, vector<8x5xf32>
    %cst_14 = arith.constant dense<0.000000e+00> : vector<8x5xf32>
    %16 = tpu.matmul %14, %15, %cst_14 {dimension_numbers = #tpu.dot_dimension_numbers<[1], [0], [0], [1], [0, 0, 1, 1], [], []>, precision = #tpu.contract_precision<fp32>} : vector<8x8xf32>, vector<8x5xf32>, vector<8x5xf32> -> vector<8x5xf32>
    %c0_15 = arith.constant 0 : index
    %c0_16 = arith.constant 0 : index
    %17 = vector.load %arg7[%c0_15, %c0_16] : memref<1x5xf32, #tpu.memory_space<vmem>>, vector<1x5xf32>
    %18 = vector.broadcast %17 : vector<1x5xf32> to vector<8x5xf32>
    %19 = arith.addf %16, %18 : vector<8x5xf32>
    %20 = vector.extract_strided_slice %19 {offsets = [0, 0], sizes = [8, 4], strides = [1, 1]} : vector<8x5xf32> to vector<8x4xf32>
    %21 = vector.extract_strided_slice %19 {offsets = [0, 4], sizes = [8, 1], strides = [1, 1]} : vector<8x5xf32> to vector<8x1xf32>
    %22 = vector.broadcast %21 : vector<8x1xf32> to vector<8x4xf32>
    %23 = arith.addf %20, %22 : vector<8x4xf32>
    %cst_17 = arith.constant dense<0.000000e+00> : vector<8xf32>
    %24 = vector.multi_reduction <add>, %20, %cst_17 [1] : vector<8x4xf32> to vector<8xf32>
    %25 = vector.shape_cast %24 : vector<8xf32> to vector<8x1xf32>
    %cst_18 = arith.constant 4.000000e+00 : f32
    %26 = vector.broadcast %cst_18 : f32 to vector<8x1xf32>
    %27 = arith.divf %25, %26 : vector<8x1xf32>
    %28 = vector.broadcast %27 : vector<8x1xf32> to vector<8x4xf32>
    %29 = arith.subf %23, %28 : vector<8x4xf32>
    %c0_19 = arith.constant 0 : index
    %c0_20 = arith.constant 0 : index
    %30 = vector.load %arg8[%c0_19, %c0_20] : memref<8x4xf32, #tpu.memory_space<vmem>>, vector<8x4xf32>
    tpu.vector_store %arg8[%c0_19, %c0_20], %29 {strides = array<i32>} : memref<8x4xf32, #tpu.memory_space<vmem>>, vector<8x4xf32>,
    return
  }
  func.func @transform_0(%arg0: i32) -> (i32, i32) {
    %c0_i32 = arith.constant 0 : i32
    %c0_i32_0 = arith.constant 0 : i32
    return %arg0, %c0_i32 : i32, i32
  }
  func.func @transform_1(%arg0: i32) -> (i32, i32) {
    %c0_i32 = arith.constant 0 : i32
    %c0_i32_0 = arith.constant 0 : i32
    %c0_i32_1 = arith.constant 0 : i32
    return %c0_i32, %c0_i32_0 : i32, i32
  }
  func.func @transform_2(%arg0: i32) -> (i32, i32) {
    %c0_i32 = arith.constant 0 : i32
    %c0_i32_0 = arith.constant 0 : i32
    %c0_i32_1 = arith.constant 0 : i32
    return %c0_i32, %c0_i32_0 : i32, i32
  }
  func.func @transform_3(%arg0: i32) -> (i32, i32) {
    %c0_i32 = arith.constant 0 : i32
    %c0_i32_0 = arith.constant 0 : i32
    %c0_i32_1 = arith.constant 0 : i32
    return %c0_i32, %c0_i32_0 : i32, i32
  }
  func.func @transform_4(%arg0: i32) -> (i32, i32) {
    %c0_i32 = arith.constant 0 : i32
    %c0_i32_0 = arith.constant 0 : i32
    %c0_i32_1 = arith.constant 0 : i32
    return %c0_i32, %c0_i32_0 : i32, i32
  }
  func.func @transform_5(%arg0: i32) -> (i32, i32) {
    %c0_i32 = arith.constant 0 : i32
    %c0_i32_0 = arith.constant 0 : i32
    %c0_i32_1 = arith.constant 0 : i32
    return %c0_i32, %c0_i32_0 : i32, i32
  }
  func.func @transform_6(%arg0: i32) -> (i32, i32) {
    %c0_i32 = arith.constant 0 : i32
    %c0_i32_0 = arith.constant 0 : i32
    %c0_i32_1 = arith.constant 0 : i32
    return %c0_i32, %c0_i32_0 : i32, i32
  }
  func.func @transform_7(%arg0: i32) -> (i32, i32) {
    %c0_i32 = arith.constant 0 : i32
    %c0_i32_0 = arith.constant 0 : i32
    return %arg0, %c0_i32 : i32, i32
  }
}

</mosaic_0001>

<llo_original>
// kernel: tpu_custom_call.1
$region0: #{tpu_custom_call.1}
  #allocation0 [shape = 'u32[]', space=smem, size = 0x4, offset = 0x4, fixed_abs, tag = 'smem constant byte address 0x4 - core index']
  #allocation1 [shape = 'u32[144,128]{1,0:T(1,128)}', space=vmem, size = 0x12000, scoped, tag = 'internal scratch']
  %s0 = inlined_call_operand.vmem [shape: f32[8,37], index: 0, kind: input, shape index: {}]
  %s1 = inlined_call_operand.vmem [shape: f32[37,16], index: 1, kind: input, shape index: {}]
  %s2 = inlined_call_operand.vmem [shape: f32[1,16], index: 2, kind: input, shape index: {}]
  %s3 = inlined_call_operand.vmem [shape: f32[16,8], index: 3, kind: input, shape index: {}]
  %s4 = inlined_call_operand.vmem [shape: f32[1,8], index: 4, kind: input, shape index: {}]
  %s5 = inlined_call_operand.vmem [shape: f32[8,5], index: 5, kind: input, shape index: {}]
  %s6 = inlined_call_operand.vmem [shape: f32[1,5], index: 6, kind: input, shape index: {}]
  %s7 = inlined_call_operand.vmem [shape: f32[8,4], index: 7, kind: output, shape index: {}]
  %s8 = sld [smem:[#allocation0]]
  $region38: #{tpu_custom_call.1} parent=0
    _
  %s10 = ssub.s32 1, %s8
  %s11 = scalar_select 0, %s10, %s8
  // Predicated region
  $region2: #{tpu_custom_call.1} parent=0 // pred_check
    _
  $region3: #{tpu_custom_call.1} parent=0 // pred_check_branch
    %13 = sbr.rel (0) target = $region5
  $region4: #{tpu_custom_call.1} parent=0 // pred_region
    _
  $region5: #{tpu_custom_call.1} parent=0 // pred_fallthru
    _
  // Predicated region
  $region6: #{tpu_custom_call.1} parent=0 // pred_check
    _
  $region7: #{tpu_custom_call.1} parent=0 // pred_check_branch
    %15 = sbr.rel (0) target = $region9
  $region8: #{tpu_custom_call.1} parent=0 // pred_region
    _
  $region9: #{tpu_custom_call.1} parent=0 // pred_fallthru
    _
  // Predicated region
  $region10: #{tpu_custom_call.1} parent=0 // pred_check
    _
  $region11: #{tpu_custom_call.1} parent=0 // pred_check_branch
    %17 = sbr.rel (0) target = $region13
  $region12: #{tpu_custom_call.1} parent=0 // pred_region
    _
  $region13: #{tpu_custom_call.1} parent=0 // pred_fallthru
    _
  // Predicated region
  $region14: #{tpu_custom_call.1} parent=0 // pred_check
    _
  $region15: #{tpu_custom_call.1} parent=0 // pred_check_branch
    %19 = sbr.rel (0) target = $region17
  $region16: #{tpu_custom_call.1} parent=0 // pred_region
    _
  $region17: #{tpu_custom_call.1} parent=0 // pred_fallthru
    _
  // Predicated region
  $region18: #{tpu_custom_call.1} parent=0 // pred_check
    _
  $region19: #{tpu_custom_call.1} parent=0 // pred_check_branch
    %21 = sbr.rel (0) target = $region21
  $region20: #{tpu_custom_call.1} parent=0 // pred_region
    _
  $region21: #{tpu_custom_call.1} parent=0 // pred_fallthru
    _
  // Predicated region
  $region22: #{tpu_custom_call.1} parent=0 // pred_check
    _
  $region23: #{tpu_custom_call.1} parent=0 // pred_check_branch
    %23 = sbr.rel (0) target = $region25
  $region24: #{tpu_custom_call.1} parent=0 // pred_region
    _
  $region25: #{tpu_custom_call.1} parent=0 // pred_fallthru
    _
  // Predicated region
  $region26: #{tpu_custom_call.1} parent=0 // pred_check
    _
  $region27: #{tpu_custom_call.1} parent=0 // pred_check_branch
    %25 = sbr.rel (0) target = $region29
  $region28: #{tpu_custom_call.1} parent=0 // pred_region
    _
  $region29: #{tpu_custom_call.1} parent=0 // pred_fallthru
    _
  %v26 = vld [vmem:[%s0] sm:$0xff]
  %v27 = vld [vmem:[%s1] sm:$0xff]
  %v28 = vld [vmem:[%s1 + $0x8] sm:$0xff]
  %v29 = vld [vmem:[%s1 + $0x10] sm:$0xff]
  %v30 = vld [vmem:[%s1 + $0x18] sm:$0xff]
  %v31 = vld [vmem:[%s1 + $0x20] sm:$0x1f]
  %v32 = vld [vmem:[%s2] sm:$0x1]
  %v34 = vlaneseq
  %v35 = vshrl.u32 %v34, 7
  %v36 = vsub.s32 0, %v35
  %v37 = vrot.slane %v32, %v36
  %vm39 = vcmask 302080
  %v41 = vsel %vm39, %v26, 0
  %vm43 = vcmask 1044480
  %v45 = vsel %vm43, %v31, 0
  %47 = vmatprep.subr.mxu0 0.0
  %v48 = vand.u32 %v27, 4294901760
  %49 = vmatpush1.msra.mxu0 %v48
  %50 = vmatprep.subr.mxu0 0.0
  %v51 = vand.u32 %v28, 4294901760
  %52 = vmatpush1.msra.mxu0 %v51
  %53 = vmatprep.subr.mxu0 0.0
  %v54 = vand.u32 %v29, 4294901760
  %55 = vmatpush1.msra.mxu0 %v54
  %56 = vmatprep.subr.mxu0 0.0
  %v57 = vand.u32 %v30, 4294901760
  %58 = vmatpush1.msra.mxu0 %v57
  %59 = vmatprep.subr.mxu0 0.0
  %v60 = vand.u32 %v45, 4294901760
  %61 = vmatpush1.msra.mxu0 %v60
  %62 = vmatprep.subr.mxu0 0.0
  %63 = vmatpush1.msra.mxu0 0.0
  %64 = vmatprep.subr.mxu0 0.0
  %65 = vmatpush1.msra.mxu0 0.0
  %66 = vmatprep.subr.mxu0 0.0
  %67 = vmatpush1.msra.mxu0 0.0
  %68 = vmatprep.subr.mxu0 0.0
  %69 = vmatpush1.msra.mxu0 0.0
  %70 = vmatprep.subr.mxu0 0.0
  %71 = vmatpush1.msra.mxu0 0.0
  %72 = vmatprep.subr.mxu0 0.0
  %73 = vmatpush1.msra.mxu0 0.0
  %74 = vmatprep.subr.mxu0 0.0
  %75 = vmatpush1.msra.mxu0 0.0
  %76 = vmatprep.subr.mxu0 0.0
  %77 = vmatpush1.msra.mxu0 0.0
  %78 = vmatprep.subr.mxu0 0.0
  %79 = vmatpush1.msra.mxu0 0.0
  %80 = vmatprep.subr.mxu0 0.0
  %81 = vmatpush1.msra.mxu0 0.0
  %82 = vmatprep.subr.mxu0 0.0
  %83 = vmatpush1.msra.mxu0 0.0
  %84 = vmatprep.subr.mxu0 0.0
  %85 = vmatpush1.msra.mxu0 0.0
  %86 = vmatprep.subr.mxu0 0.0
  %87 = vmatpush1.msra.mxu0 0.0
  %88 = vmatprep.subr.mxu0 0.0
  %89 = vmatpush1.msra.mxu0 0.0
  %90 = vmatprep.subr.mxu0 0.0
  %91 = vmatpush1.msra.mxu0 0.0
  %92 = vmatprep.subr.mxu0 0.0
  %93 = vmatpush1.msra.mxu0 0.0
  %94 = vmatprep.subr.mxu0 0.0
  %95 = vmatpush1.msra.mxu0 0.0
  %96 = vmatprep.subr.mxu0 0.0
  %97 = vmatpush1.msra.mxu0 0.0
  %98 = vmatprep.subr.mxu0 0.0
  %99 = vmatpush1.msra.mxu0 0.0
  %100 = vmatprep.subr.mxu0 0.0
  %101 = vmatpush1.msra.mxu0 0.0
  %102 = vmatprep.subr.mxu0 0.0
  %103 = vmatpush1.msra.mxu0 0.0
  %104 = vmatprep.subr.mxu0 0.0
  %105 = vmatpush1.msra.mxu0 0.0
  %106 = vmatprep.subr.mxu0 0.0
  %107 = vmatpush1.msra.mxu0 0.0
  %108 = vmatprep.subr.mxu0 0.0
  %109 = vmatpush1.msra.mxu0 0.0
  %110 = vmatprep.subr.mxu0 0.0
  %111 = vmatpush1.msra.mxu0 0.0
  %112 = vmatprep.subr.mxu0 0.0
  %113 = vmatpush1.msra.mxu0 0.0
  %114 = vmatprep.subr.mxu0 0.0
  %115 = vmatpush1.msra.mxu0 0.0
  %116 = vmatprep.mubr.f32.mxu0 0.0
  %v117 = vand.u32 %v41, 4294901760
  %v118 = vsub.f32 %v41, %v117
  %v119 = vand.u32 %v118, 4294901760
  %v120 = vsub.f32 %v118, %v119
  %v121 = vand.u32 %v120, 4294901760
  %122 = vmatmul.mubr.f32.gmra.mrb[0].mxu0 %v121
  %v123 = vpop.f32.mrb[0].mxu0
  %v124 = vadd.f32 %v37, %v123
  %v125 = vpop.f32.mrb[0].mxu0
  %126 = vdwg.mxu0
  %127 = vmatprep.subr.mxu0 0.0
  %v128 = vand.u32 %v27, 4294901760
  %v129 = vsub.f32 %v27, %v128
  %v130 = vand.u32 %v129, 4294901760
  %v131 = vsub.f32 %v129, %v130
  %v132 = vand.u32 %v131, 4294901760
  %133 = vmatpush1.msra.mxu0 %v132
  %134 = vmatprep.subr.mxu0 0.0
  %v135 = vand.u32 %v28, 4294901760
  %v136 = vsub.f32 %v28, %v135
  %v137 = vand.u32 %v136, 4294901760
  %v138 = vsub.f32 %v136, %v137
  %v139 = vand.u32 %v138, 4294901760
  %140 = vmatpush1.msra.mxu0 %v139
  %141 = vmatprep.subr.mxu0 0.0
  %v142 = vand.u32 %v29, 4294901760
  %v143 = vsub.f32 %v29, %v142
  %v144 = vand.u32 %v143, 4294901760
  %v145 = vsub.f32 %v143, %v144
  %v146 = vand.u32 %v145, 4294901760
  %147 = vmatpush1.msra.mxu0 %v146
  %148 = vmatprep.subr.mxu0 0.0
  %v149 = vand.u32 %v30, 4294901760
  %v150 = vsub.f32 %v30, %v149
  %v151 = vand.u32 %v150, 4294901760
  %v152 = vsub.f32 %v150, %v151
  %v153 = vand.u32 %v152, 4294901760
  %154 = vmatpush1.msra.mxu0 %v153
  %155 = vmatprep.subr.mxu0 0.0
  %v156 = vand.u32 %v45, 4294901760
  %v157 = vsub.f32 %v45, %v156
  %v158 = vand.u32 %v157, 4294901760
  %v159 = vsub.f32 %v157, %v158
  %v160 = vand.u32 %v159, 4294901760
  %161 = vmatpush1.msra.mxu0 %v160
  %162 = vmatprep.subr.mxu0 0.0
  %163 = vmatpush1.msra.mxu0 0.0
  %164 = vmatprep.subr.mxu0 0.0
  %165 = vmatpush1.msra.mxu0 0.0
  %166 = vmatprep.subr.mxu0 0.0
  %167 = vmatpush1.msra.mxu0 0.0
  %168 = vmatprep.subr.mxu0 0.0
  %169 = vmatpush1.msra.mxu0 0.0
  %170 = vmatprep.subr.mxu0 0.0
  %171 = vmatpush1.msra.mxu0 0.0
  %172 = vmatprep.subr.mxu0 0.0
  %173 = vmatpush1.msra.mxu0 0.0
  %174 = vmatprep.subr.mxu0 0.0
  %175 = vmatpush1.msra.mxu0 0.0
  %176 = vmatprep.subr.mxu0 0.0
  %177 = vmatpush1.msra.mxu0 0.0
  %178 = vmatprep.subr.mxu0 0.0
  %179 = vmatpush1.msra.mxu0 0.0
  %180 = vmatprep.subr.mxu0 0.0
  %181 = vmatpush1.msra.mxu0 0.0
  %182 = vmatprep.subr.mxu0 0.0
  %183 = vmatpush1.msra.mxu0 0.0
  %184 = vmatprep.subr.mxu0 0.0
  %185 = vmatpush1.msra.mxu0 0.0
  %186 = vmatprep.subr.mxu0 0.0
  %187 = vmatpush1.msra.mxu0 0.0
  %188 = vmatprep.subr.mxu0 0.0
  %189 = vmatpush1.msra.mxu0 0.0
  %190 = vmatprep.subr.mxu0 0.0
  %191 = vmatpush1.msra.mxu0 0.0
  %192 = vmatprep.subr.mxu0 0.0
  %193 = vmatpush1.msra.mxu0 0.0
  %194 = vmatprep.subr.mxu0 0.0
  %195 = vmatpush1.msra.mxu0 0.0
  %196 = vmatprep.subr.mxu0 0.0
  %197 = vmatpush1.msra.mxu0 0.0
  %198 = vmatprep.subr.mxu0 0.0
  %199 = vmatpush1.msra.mxu0 0.0
  %200 = vmatprep.subr.mxu0 0.0
  %201 = vmatpush1.msra.mxu0 0.0
  %202 = vmatprep.subr.mxu0 0.0
  %203 = vmatpush1.msra.mxu0 0.0
  %204 = vmatprep.subr.mxu0 0.0
  %205 = vmatpush1.msra.mxu0 0.0
  %206 = vmatprep.subr.mxu0 0.0
  %207 = vmatpush1.msra.mxu0 0.0
  %208 = vmatprep.subr.mxu0 0.0
  %209 = vmatpush1.msra.mxu0 0.0
  %210 = vmatprep.subr.mxu0 0.0
  %211 = vmatpush1.msra.mxu0 0.0
  %212 = vmatprep.subr.mxu0 0.0
  %213 = vmatpush1.msra.mxu0 0.0
  %214 = vmatprep.subr.mxu0 0.0
  %215 = vmatpush1.msra.mxu0 0.0
  %216 = vmatprep.mubr.f32.mxu0 0.0
  %v217 = vand.u32 %v41, 4294901760
  %218 = vmatmul.mubr.f32.gmra.mrb[0].mxu0 %v217
  %v219 = vpop.f32.mrb[0].mxu0
  %v220 = vadd.f32 %v124, %v219
  %v221 = vpop.f32.mrb[0].mxu0
  %222 = vdwg.mxu0
  %223 = vmatprep.subr.mxu0 0.0
  %v224 = vand.u32 %v27, 4294901760
  %v225 = vsub.f32 %v27, %v224
  %226 = vmatpush1.msra.mxu0 %v225
  %227 = vmatprep.subr.mxu0 0.0
  %v228 = vand.u32 %v28, 4294901760
  %v229 = vsub.f32 %v28, %v228
  %230 = vmatpush1.msra.mxu0 %v229
  %231 = vmatprep.subr.mxu0 0.0
  %v232 = vand.u32 %v29, 4294901760
  %v233 = vsub.f32 %v29, %v232
  %234 = vmatpush1.msra.mxu0 %v233
  %235 = vmatprep.subr.mxu0 0.0
  %v236 = vand.u32 %v30, 4294901760
  %v237 = vsub.f32 %v30, %v236
  %238 = vmatpush1.msra.mxu0 %v237
  %239 = vmatprep.subr.mxu0 0.0
  %v240 = vand.u32 %v45, 4294901760
  %v241 = vsub.f32 %v45, %v240
  %242 = vmatpush1.msra.mxu0 %v241
  %243 = vmatprep.subr.mxu0 0.0
  %244 = vmatpush1.msra.mxu0 0.0
  %245 = vmatprep.subr.mxu0 0.0
  %246 = vmatpush1.msra.mxu0 0.0
  %247 = vmatprep.subr.mxu0 0.0
  %248 = vmatpush1.msra.mxu0 0.0
  %249 = vmatprep.subr.mxu0 0.0
  %250 = vmatpush1.msra.mxu0 0.0
  %251 = vmatprep.subr.mxu0 0.0
  %252 = vmatpush1.msra.mxu0 0.0
  %253 = vmatprep.subr.mxu0 0.0
  %254 = vmatpush1.msra.mxu0 0.0
  %255 = vmatprep.subr.mxu0 0.0
  %256 = vmatpush1.msra.mxu0 0.0
  %257 = vmatprep.subr.mxu0 0.0
  %258 = vmatpush1.msra.mxu0 0.0
  %259 = vmatprep.subr.mxu0 0.0
  %260 = vmatpush1.msra.mxu0 0.0
  %261 = vmatprep.subr.mxu0 0.0
  %262 = vmatpush1.msra.mxu0 0.0
  %263 = vmatprep.subr.mxu0 0.0
  %264 = vmatpush1.msra.mxu0 0.0
  %265 = vmatprep.subr.mxu0 0.0
  %266 = vmatpush1.msra.mxu0 0.0
  %267 = vmatprep.subr.mxu0 0.0
  %268 = vmatpush1.msra.mxu0 0.0
  %269 = vmatprep.subr.mxu0 0.0
  %270 = vmatpush1.msra.mxu0 0.0
  %271 = vmatprep.subr.mxu0 0.0
  %272 = vmatpush1.msra.mxu0 0.0
  %273 = vmatprep.subr.mxu0 0.0
  %274 = vmatpush1.msra.mxu0 0.0
  %275 = vmatprep.subr.mxu0 0.0
  %276 = vmatpush1.msra.mxu0 0.0
  %277 = vmatprep.subr.mxu0 0.0
  %278 = vmatpush1.msra.mxu0 0.0
  %279 = vmatprep.subr.mxu0 0.0
  %280 = vmatpush1.msra.mxu0 0.0
  %281 = vmatprep.subr.mxu0 0.0
  %282 = vmatpush1.msra.mxu0 0.0
  %283 = vmatprep.subr.mxu0 0.0
  %284 = vmatpush1.msra.mxu0 0.0
  %285 = vmatprep.subr.mxu0 0.0
  %286 = vmatpush1.msra.mxu0 0.0
  %287 = vmatprep.subr.mxu0 0.0
  %288 = vmatpush1.msra.mxu0 0.0
  %289 = vmatprep.subr.mxu0 0.0
  %290 = vmatpush1.msra.mxu0 0.0
  %291 = vmatprep.subr.mxu0 0.0
  %292 = vmatpush1.msra.mxu0 0.0
  %293 = vmatprep.subr.mxu0 0.0
  %294 = vmatpush1.msra.mxu0 0.0
  %295 = vmatprep.subr.mxu0 0.0
  %296 = vmatpush1.msra.mxu0 0.0
  %297 = vmatprep.mubr.f32.mxu0 0.0
  %v298 = vand.u32 %v41, 4294901760
  %v299 = vsub.f32 %v41, %v298
  %300 = vmatmul.mubr.f32.gmra.mrb[0].mxu0 %v299
  %v301 = vpop.f32.mrb[0].mxu0
  %v302 = vadd.f32 %v220, %v301
  %v303 = vpop.f32.mrb[0].mxu0
  %304 = vdwg.mxu0
  %305 = vmatprep.subr.mxu0 0.0
  %v306 = vand.u32 %v27, 4294901760
  %307 = vmatpush1.msra.mxu0 %v306
  %308 = vmatprep.subr.mxu0 0.0
  %v309 = vand.u32 %v28, 4294901760
  %310 = vmatpush1.msra.mxu0 %v309
  %311 = vmatprep.subr.mxu0 0.0
  %v312 = vand.u32 %v29, 4294901760
  %313 = vmatpush1.msra.mxu0 %v312
  %314 = vmatprep.subr.mxu0 0.0
  %v315 = vand.u32 %v30, 4294901760
  %316 = vmatpush1.msra.mxu0 %v315
  %317 = vmatprep.subr.mxu0 0.0
  %v318 = vand.u32 %v45, 4294901760
  %319 = vmatpush1.msra.mxu0 %v318
  %320 = vmatprep.subr.mxu0 0.0
  %321 = vmatpush1.msra.mxu0 0.0
  %322 = vmatprep.subr.mxu0 0.0
  %323 = vmatpush1.msra.mxu0 0.0
  %324 = vmatprep.subr.mxu0 0.0
  %325 = vmatpush1.msra.mxu0 0.0
  %326 = vmatprep.subr.mxu0 0.0
  %327 = vmatpush1.msra.mxu0 0.0
  %328 = vmatprep.subr.mxu0 0.0
  %329 = vmatpush1.msra.mxu0 0.0
  %330 = vmatprep.subr.mxu0 0.0
  %331 = vmatpush1.msra.mxu0 0.0
  %332 = vmatprep.subr.mxu0 0.0
  %333 = vmatpush1.msra.mxu0 0.0
  %334 = vmatprep.subr.mxu0 0.0
  %335 = vmatpush1.msra.mxu0 0.0
  %336 = vmatprep.subr.mxu0 0.0
  %337 = vmatpush1.msra.mxu0 0.0
  %338 = vmatprep.subr.mxu0 0.0
  %339 = vmatpush1.msra.mxu0 0.0
  %340 = vmatprep.subr.mxu0 0.0
  %341 = vmatpush1.msra.mxu0 0.0
  %342 = vmatprep.subr.mxu0 0.0
  %343 = vmatpush1.msra.mxu0 0.0
  %344 = vmatprep.subr.mxu0 0.0
  %345 = vmatpush1.msra.mxu0 0.0
  %346 = vmatprep.subr.mxu0 0.0
  %347 = vmatpush1.msra.mxu0 0.0
  %348 = vmatprep.subr.mxu0 0.0
  %349 = vmatpush1.msra.mxu0 0.0
  %350 = vmatprep.subr.mxu0 0.0
  %351 = vmatpush1.msra.mxu0 0.0
  %352 = vmatprep.subr.mxu0 0.0
  %353 = vmatpush1.msra.mxu0 0.0
  %354 = vmatprep.subr.mxu0 0.0
  %355 = vmatpush1.msra.mxu0 0.0
  %356 = vmatprep.subr.mxu0 0.0
  %357 = vmatpush1.msra.mxu0 0.0
  %358 = vmatprep.subr.mxu0 0.0
  %359 = vmatpush1.msra.mxu0 0.0
  %360 = vmatprep.subr.mxu0 0.0
  %361 = vmatpush1.msra.mxu0 0.0
  %362 = vmatprep.subr.mxu0 0.0
  %363 = vmatpush1.msra.mxu0 0.0
  %364 = vmatprep.subr.mxu0 0.0
  %365 = vmatpush1.msra.mxu0 0.0
  %366 = vmatprep.subr.mxu0 0.0
  %367 = vmatpush1.msra.mxu0 0.0
  %368 = vmatprep.subr.mxu0 0.0
  %369 = vmatpush1.msra.mxu0 0.0
  %370 = vmatprep.subr.mxu0 0.0
  %371 = vmatpush1.msra.mxu0 0.0
  %372 = vmatprep.subr.mxu0 0.0
  %373 = vmatpush1.msra.mxu0 0.0
  %374 = vmatprep.mubr.f32.mxu0 0.0
  %v375 = vand.u32 %v41, 4294901760
  %v376 = vsub.f32 %v41, %v375
  %v377 = vand.u32 %v376, 4294901760
  %378 = vmatmul.mubr.f32.gmra.mrb[0].mxu0 %v377
  %v379 = vpop.f32.mrb[0].mxu0
  %v380 = vadd.f32 %v302, %v379
  %v381 = vpop.f32.mrb[0].mxu0
  %382 = vdwg.mxu0
  %383 = vmatprep.subr.mxu0 0.0
  %v384 = vand.u32 %v27, 4294901760
  %v385 = vsub.f32 %v27, %v384
  %v386 = vand.u32 %v385, 4294901760
  %387 = vmatpush1.msra.mxu0 %v386
  %388 = vmatprep.subr.mxu0 0.0
  %v389 = vand.u32 %v28, 4294901760
  %v390 = vsub.f32 %v28, %v389
  %v391 = vand.u32 %v390, 4294901760
  %392 = vmatpush1.msra.mxu0 %v391
  %393 = vmatprep.subr.mxu0 0.0
  %v394 = vand.u32 %v29, 4294901760
  %v395 = vsub.f32 %v29, %v394
  %v396 = vand.u32 %v395, 4294901760
  %397 = vmatpush1.msra.mxu0 %v396
  %398 = vmatprep.subr.mxu0 0.0
  %v399 = vand.u32 %v30, 4294901760
  %v400 = vsub.f32 %v30, %v399
  %v401 = vand.u32 %v400, 4294901760
  %402 = vmatpush1.msra.mxu0 %v401
  %403 = vmatprep.subr.mxu0 0.0
  %v404 = vand.u32 %v45, 4294901760
  %v405 = vsub.f32 %v45, %v404
  %v406 = vand.u32 %v405, 4294901760
  %407 = vmatpush1.msra.mxu0 %v406
  %408 = vmatprep.subr.mxu0 0.0
  %409 = vmatpush1.msra.mxu0 0.0
  %410 = vmatprep.subr.mxu0 0.0
  %411 = vmatpush1.msra.mxu0 0.0
  %412 = vmatprep.subr.mxu0 0.0
  %413 = vmatpush1.msra.mxu0 0.0
  %414 = vmatprep.subr.mxu0 0.0
  %415 = vmatpush1.msra.mxu0 0.0
  %416 = vmatprep.subr.mxu0 0.0
  %417 = vmatpush1.msra.mxu0 0.0
  %418 = vmatprep.subr.mxu0 0.0
  %419 = vmatpush1.msra.mxu0 0.0
  %420 = vmatprep.subr.mxu0 0.0
  %421 = vmatpush1.msra.mxu0 0.0
  %422 = vmatprep.subr.mxu0 0.0
  %423 = vmatpush1.msra.mxu0 0.0
  %424 = vmatprep.subr.mxu0 0.0
  %425 = vmatpush1.msra.mxu0 0.0
  %426 = vmatprep.subr.mxu0 0.0
  %427 = vmatpush1.msra.mxu0 0.0
  %428 = vmatprep.subr.mxu0 0.0
  %429 = vmatpush1.msra.mxu0 0.0
  %430 = vmatprep.subr.mxu0 0.0
  %431 = vmatpush1.msra.mxu0 0.0
  %432 = vmatprep.subr.mxu0 0.0
  %433 = vmatpush1.msra.mxu0 0.0
  %434 = vmatprep.subr.mxu0 0.0
  %435 = vmatpush1.msra.mxu0 0.0
  %436 = vmatprep.subr.mxu0 0.0
  %437 = vmatpush1.msra.mxu0 0.0
  %438 = vmatprep.subr.mxu0 0.0
  %439 = vmatpush1.msra.mxu0 0.0
  %440 = vmatprep.subr.mxu0 0.0
  %441 = vmatpush1.msra.mxu0 0.0
  %442 = vmatprep.subr.mxu0 0.0
  %443 = vmatpush1.msra.mxu0 0.0
  %444 = vmatprep.subr.mxu0 0.0
  %445 = vmatpush1.msra.mxu0 0.0
  %446 = vmatprep.subr.mxu0 0.0
  %447 = vmatpush1.msra.mxu0 0.0
  %448 = vmatprep.subr.mxu0 0.0
  %449 = vmatpush1.msra.mxu0 0.0
  %450 = vmatprep.subr.mxu0 0.0
  %451 = vmatpush1.msra.mxu0 0.0
  %452 = vmatprep.subr.mxu0 0.0
  %453 = vmatpush1.msra.mxu0 0.0
  %454 = vmatprep.subr.mxu0 0.0
  %455 = vmatpush1.msra.mxu0 0.0
  %456 = vmatprep.subr.mxu0 0.0
  %457 = vmatpush1.msra.mxu0 0.0
  %458 = vmatprep.subr.mxu0 0.0
  %459 = vmatpush1.msra.mxu0 0.0
  %460 = vmatprep.subr.mxu0 0.0
  %461 = vmatpush1.msra.mxu0 0.0
  %462 = vmatprep.mubr.f32.mxu0 0.0
  %v463 = vand.u32 %v41, 4294901760
  %464 = vmatmul.mubr.f32.gmra.mrb[0].mxu0 %v463
  %v465 = vpop.f32.mrb[0].mxu0
  %v466 = vadd.f32 %v380, %v465
  %v467 = vpop.f32.mrb[0].mxu0
  %468 = vdwg.mxu0
  %469 = vmatprep.subr.mxu0 0.0
  %v470 = vand.u32 %v27, 4294901760
  %471 = vmatpush1.msra.mxu0 %v470
  %472 = vmatprep.subr.mxu0 0.0
  %v473 = vand.u32 %v28, 4294901760
  %474 = vmatpush1.msra.mxu0 %v473
  %475 = vmatprep.subr.mxu0 0.0
  %v476 = vand.u32 %v29, 4294901760
  %477 = vmatpush1.msra.mxu0 %v476
  %478 = vmatprep.subr.mxu0 0.0
  %v479 = vand.u32 %v30, 4294901760
  %480 = vmatpush1.msra.mxu0 %v479
  %481 = vmatprep.subr.mxu0 0.0
  %v482 = vand.u32 %v45, 4294901760
  %483 = vmatpush1.msra.mxu0 %v482
  %484 = vmatprep.subr.mxu0 0.0
  %485 = vmatpush1.msra.mxu0 0.0
  %486 = vmatprep.subr.mxu0 0.0
  %487 = vmatpush1.msra.mxu0 0.0
  %488 = vmatprep.subr.mxu0 0.0
  %489 = vmatpush1.msra.mxu0 0.0
  %490 = vmatprep.subr.mxu0 0.0
  %491 = vmatpush1.msra.mxu0 0.0
  %492 = vmatprep.subr.mxu0 0.0
  %493 = vmatpush1.msra.mxu0 0.0
  %494 = vmatprep.subr.mxu0 0.0
  %495 = vmatpush1.msra.mxu0 0.0
  %496 = vmatprep.subr.mxu0 0.0
  %497 = vmatpush1.msra.mxu0 0.0
  %498 = vmatprep.subr.mxu0 0.0
  %499 = vmatpush1.msra.mxu0 0.0
  %500 = vmatprep.subr.mxu0 0.0
  %501 = vmatpush1.msra.mxu0 0.0
  %502 = vmatprep.subr.mxu0 0.0
  %503 = vmatpush1.msra.mxu0 0.0
  %504 = vmatprep.subr.mxu0 0.0
  %505 = vmatpush1.msra.mxu0 0.0
  %506 = vmatprep.subr.mxu0 0.0
  %507 = vmatpush1.msra.mxu0 0.0
  %508 = vmatprep.subr.mxu0 0.0
  %509 = vmatpush1.msra.mxu0 0.0
  %510 = vmatprep.subr.mxu0 0.0
  %511 = vmatpush1.msra.mxu0 0.0
  %512 = vmatprep.subr.mxu0 0.0
  %513 = vmatpush1.msra.mxu0 0.0
  %514 = vmatprep.subr.mxu0 0.0
  %515 = vmatpush1.msra.mxu0 0.0
  %516 = vmatprep.subr.mxu0 0.0
  %517 = vmatpush1.msra.mxu0 0.0
  %518 = vmatprep.subr.mxu0 0.0
  %519 = vmatpush1.msra.mxu0 0.0
  %520 = vmatprep.subr.mxu0 0.0
  %521 = vmatpush1.msra.mxu0 0.0
  %522 = vmatprep.subr.mxu0 0.0
  %523 = vmatpush1.msra.mxu0 0.0
  %524 = vmatprep.subr.mxu0 0.0
  %525 = vmatpush1.msra.mxu0 0.0
  %526 = vmatprep.subr.mxu0 0.0
  %527 = vmatpush1.msra.mxu0 0.0
  %528 = vmatprep.subr.mxu0 0.0
  %529 = vmatpush1.msra.mxu0 0.0
  %530 = vmatprep.subr.mxu0 0.0
  %531 = vmatpush1.msra.mxu0 0.0
  %532 = vmatprep.subr.mxu0 0.0
  %533 = vmatpush1.msra.mxu0 0.0
  %534 = vmatprep.subr.mxu0 0.0
  %535 = vmatpush1.msra.mxu0 0.0
  %536 = vmatprep.subr.mxu0 0.0
  %537 = vmatpush1.msra.mxu0 0.0
  %538 = vmatprep.mubr.f32.mxu0 0.0
  %v539 = vand.u32 %v41, 4294901760
  %540 = vmatmul.mubr.f32.gmra.mrb[0].mxu0 %v539
  %v541 = vpop.f32.mrb[0].mxu0
  %v542 = vadd.f32 %v466, %v541
  %v543 = vpop.f32.mrb[0].mxu0
  %544 = vdwg.mxu0
  %v545 = vmax.f32 %v542, 0.0
  %v546 = vld [vmem:[%s3] sm:$0xff]
  %v547 = vld [vmem:[%s3 + $0x8] sm:$0xff]
  %v548 = vld [vmem:[%s4] sm:$0x1]
  %v550 = vlaneseq
  %v551 = vshrl.u32 %v550, 7
  %v552 = vsub.s32 0, %v551
  %v553 = vrot.slane %v548, %v552
  %vm555 = vcmask 130048
  %v557 = vsel %vm555, %v545, 0
  %559 = vmatprep.subr.mxu0 0.0
  %v560 = vand.u32 %v546, 4294901760
  %561 = vmatpush1.msra.mxu0 %v560
  %562 = vmatprep.subr.mxu0 0.0
  %v563 = vand.u32 %v547, 4294901760
  %564 = vmatpush1.msra.mxu0 %v563
  %565 = vmatprep.subr.mxu0 0.0
  %566 = vmatpush1.msra.mxu0 0.0
  %567 = vmatprep.subr.mxu0 0.0
  %568 = vmatpush1.msra.mxu0 0.0
  %569 = vmatprep.subr.mxu0 0.0
  %570 = vmatpush1.msra.mxu0 0.0
  %571 = vmatprep.subr.mxu0 0.0
  %572 = vmatpush1.msra.mxu0 0.0
  %573 = vmatprep.subr.mxu0 0.0
  %574 = vmatpush1.msra.mxu0 0.0
  %575 = vmatprep.subr.mxu0 0.0
  %576 = vmatpush1.msra.mxu0 0.0
  %577 = vmatprep.subr.mxu0 0.0
  %578 = vmatpush1.msra.mxu0 0.0
  %579 = vmatprep.subr.mxu0 0.0
  %580 = vmatpush1.msra.mxu0 0.0
  %581 = vmatprep.subr.mxu0 0.0
  %582 = vmatpush1.msra.mxu0 0.0
  %583 = vmatprep.subr.mxu0 0.0
  %584 = vmatpush1.msra.mxu0 0.0
  %585 = vmatprep.subr.mxu0 0.0
  %586 = vmatpush1.msra.mxu0 0.0
  %587 = vmatprep.subr.mxu0 0.0
  %588 = vmatpush1.msra.mxu0 0.0
  %589 = vmatprep.subr.mxu0 0.0
  %590 = vmatpush1.msra.mxu0 0.0
  %591 = vmatprep.subr.mxu0 0.0
  %592 = vmatpush1.msra.mxu0 0.0
  %593 = vmatprep.subr.mxu0 0.0
  %594 = vmatpush1.msra.mxu0 0.0
  %595 = vmatprep.subr.mxu0 0.0
  %596 = vmatpush1.msra.mxu0 0.0
  %597 = vmatprep.subr.mxu0 0.0
  %598 = vmatpush1.msra.mxu0 0.0
  %599 = vmatprep.subr.mxu0 0.0
  %600 = vmatpush1.msra.mxu0 0.0
  %601 = vmatprep.subr.mxu0 0.0
  %602 = vmatpush1.msra.mxu0 0.0
  %603 = vmatprep.subr.mxu0 0.0
  %604 = vmatpush1.msra.mxu0 0.0
  %605 = vmatprep.subr.mxu0 0.0
  %606 = vmatpush1.msra.mxu0 0.0
  %607 = vmatprep.subr.mxu0 0.0
  %608 = vmatpush1.msra.mxu0 0.0
  %609 = vmatprep.subr.mxu0 0.0
  %610 = vmatpush1.msra.mxu0 0.0
  %611 = vmatprep.subr.mxu0 0.0
  %612 = vmatpush1.msra.mxu0 0.0
  %613 = vmatprep.subr.mxu0 0.0
  %614 = vmatpush1.msra.mxu0 0.0
  %615 = vmatprep.subr.mxu0 0.0
  %616 = vmatpush1.msra.mxu0 0.0
  %617 = vmatprep.subr.mxu0 0.0
  %618 = vmatpush1.msra.mxu0 0.0
  %619 = vmatprep.subr.mxu0 0.0
  %620 = vmatpush1.msra.mxu0 0.0
  %621 = vmatprep.subr.mxu0 0.0
  %622 = vmatpush1.msra.mxu0 0.0
  %623 = vmatprep.subr.mxu0 0.0
  %624 = vmatpush1.msra.mxu0 0.0
  %625 = vmatprep.mubr.f32.mxu0 0.0
  %v626 = vand.u32 %v557, 4294901760
  %v627 = vsub.f32 %v557, %v626
  %v628 = vand.u32 %v627, 4294901760
  %v629 = vsub.f32 %v627, %v628
  %v630 = vand.u32 %v629, 4294901760
  %631 = vmatmul.mubr.f32.gmra.mrb[0].mxu0 %v630
  %v632 = vpop.f32.mrb[0].mxu0
  %v633 = vadd.f32 %v553, %v632
  %v634 = vpop.f32.mrb[0].mxu0
  %635 = vdwg.mxu0
  %636 = vmatprep.subr.mxu0 0.0
  %v637 = vand.u32 %v546, 4294901760
  %v638 = vsub.f32 %v546, %v637
  %v639 = vand.u32 %v638, 4294901760
  %v640 = vsub.f32 %v638, %v639
  %v641 = vand.u32 %v640, 4294901760
  %642 = vmatpush1.msra.mxu0 %v641
  %643 = vmatprep.subr.mxu0 0.0
  %v644 = vand.u32 %v547, 4294901760
  %v645 = vsub.f32 %v547, %v644
  %v646 = vand.u32 %v645, 4294901760
  %v647 = vsub.f32 %v645, %v646
  %v648 = vand.u32 %v647, 4294901760
  %649 = vmatpush1.msra.mxu0 %v648
  %650 = vmatprep.subr.mxu0 0.0
  %651 = vmatpush1.msra.mxu0 0.0
  %652 = vmatprep.subr.mxu0 0.0
  %653 = vmatpush1.msra.mxu0 0.0
  %654 = vmatprep.subr.mxu0 0.0
  %655 = vmatpush1.msra.mxu0 0.0
  %656 = vmatprep.subr.mxu0 0.0
  %657 = vmatpush1.msra.mxu0 0.0
  %658 = vmatprep.subr.mxu0 0.0
  %659 = vmatpush1.msra.mxu0 0.0
  %660 = vmatprep.subr.mxu0 0.0
  %661 = vmatpush1.msra.mxu0 0.0
  %662 = vmatprep.subr.mxu0 0.0
  %663 = vmatpush1.msra.mxu0 0.0
  %664 = vmatprep.subr.mxu0 0.0
  %665 = vmatpush1.msra.mxu0 0.0
  %666 = vmatprep.subr.mxu0 0.0
  %667 = vmatpush1.msra.mxu0 0.0
  %668 = vmatprep.subr.mxu0 0.0
  %669 = vmatpush1.msra.mxu0 0.0
  %670 = vmatprep.subr.mxu0 0.0
  %671 = vmatpush1.msra.mxu0 0.0
  %672 = vmatprep.subr.mxu0 0.0
  %673 = vmatpush1.msra.mxu0 0.0
  %674 = vmatprep.subr.mxu0 0.0
  %675 = vmatpush1.msra.mxu0 0.0
  %676 = vmatprep.subr.mxu0 0.0
  %677 = vmatpush1.msra.mxu0 0.0
  %678 = vmatprep.subr.mxu0 0.0
  %679 = vmatpush1.msra.mxu0 0.0
  %680 = vmatprep.subr.mxu0 0.0
  %681 = vmatpush1.msra.mxu0 0.0
  %682 = vmatprep.subr.mxu0 0.0
  %683 = vmatpush1.msra.mxu0 0.0
  %684 = vmatprep.subr.mxu0 0.0
  %685 = vmatpush1.msra.mxu0 0.0
  %686 = vmatprep.subr.mxu0 0.0
  %687 = vmatpush1.msra.mxu0 0.0
  %688 = vmatprep.subr.mxu0 0.0
  %689 = vmatpush1.msra.mxu0 0.0
  %690 = vmatprep.subr.mxu0 0.0
  %691 = vmatpush1.msra.mxu0 0.0
  %692 = vmatprep.subr.mxu0 0.0
  %693 = vmatpush1.msra.mxu0 0.0
  %694 = vmatprep.subr.mxu0 0.0
  %695 = vmatpush1.msra.mxu0 0.0
  %696 = vmatprep.subr.mxu0 0.0
  %697 = vmatpush1.msra.mxu0 0.0
  %698 = vmatprep.subr.mxu0 0.0
  %699 = vmatpush1.msra.mxu0 0.0
  %700 = vmatprep.subr.mxu0 0.0
  %701 = vmatpush1.msra.mxu0 0.0
  %702 = vmatprep.subr.mxu0 0.0
  %703 = vmatpush1.msra.mxu0 0.0
  %704 = vmatprep.subr.mxu0 0.0
  %705 = vmatpush1.msra.mxu0 0.0
  %706 = vmatprep.subr.mxu0 0.0
  %707 = vmatpush1.msra.mxu0 0.0
  %708 = vmatprep.subr.mxu0 0.0
  %709 = vmatpush1.msra.mxu0 0.0
  %710 = vmatprep.mubr.f32.mxu0 0.0
  %v711 = vand.u32 %v557, 4294901760
  %712 = vmatmul.mubr.f32.gmra.mrb[0].mxu0 %v711
  %v713 = vpop.f32.mrb[0].mxu0
  %v714 = vadd.f32 %v633, %v713
  %v715 = vpop.f32.mrb[0].mxu0
  %716 = vdwg.mxu0
  %717 = vmatprep.subr.mxu0 0.0
  %v718 = vand.u32 %v546, 4294901760
  %v719 = vsub.f32 %v546, %v718
  %720 = vmatpush1.msra.mxu0 %v719
  %721 = vmatprep.subr.mxu0 0.0
  %v722 = vand.u32 %v547, 4294901760
  %v723 = vsub.f32 %v547, %v722
  %724 = vmatpush1.msra.mxu0 %v723
  %725 = vmatprep.subr.mxu0 0.0
  %726 = vmatpush1.msra.mxu0 0.0
  %727 = vmatprep.subr.mxu0 0.0
  %728 = vmatpush1.msra.mxu0 0.0
  %729 = vmatprep.subr.mxu0 0.0
  %730 = vmatpush1.msra.mxu0 0.0
  %731 = vmatprep.subr.mxu0 0.0
  %732 = vmatpush1.msra.mxu0 0.0
  %733 = vmatprep.subr.mxu0 0.0
  %734 = vmatpush1.msra.mxu0 0.0
  %735 = vmatprep.subr.mxu0 0.0
  %736 = vmatpush1.msra.mxu0 0.0
  %737 = vmatprep.subr.mxu0 0.0
  %738 = vmatpush1.msra.mxu0 0.0
  %739 = vmatprep.subr.mxu0 0.0
  %740 = vmatpush1.msra.mxu0 0.0
  %741 = vmatprep.subr.mxu0 0.0
  %742 = vmatpush1.msra.mxu0 0.0
  %743 = vmatprep.subr.mxu0 0.0
  %744 = vmatpush1.msra.mxu0 0.0
  %745 = vmatprep.subr.mxu0 0.0
  %746 = vmatpush1.msra.mxu0 0.0
  %747 = vmatprep.subr.mxu0 0.0
  %748 = vmatpush1.msra.mxu0 0.0
  %749 = vmatprep.subr.mxu0 0.0
  %750 = vmatpush1.msra.mxu0 0.0
  %751 = vmatprep.subr.mxu0 0.0
  %752 = vmatpush1.msra.mxu0 0.0
  %753 = vmatprep.subr.mxu0 0.0
  %754 = vmatpush1.msra.mxu0 0.0
  %755 = vmatprep.subr.mxu0 0.0
  %756 = vmatpush1.msra.mxu0 0.0
  %757 = vmatprep.subr.mxu0 0.0
  %758 = vmatpush1.msra.mxu0 0.0
  %759 = vmatprep.subr.mxu0 0.0
  %760 = vmatpush1.msra.mxu0 0.0
  %761 = vmatprep.subr.mxu0 0.0
  %762 = vmatpush1.msra.mxu0 0.0
  %763 = vmatprep.subr.mxu0 0.0
  %764 = vmatpush1.msra.mxu0 0.0
  %765 = vmatprep.subr.mxu0 0.0
  %766 = vmatpush1.msra.mxu0 0.0
  %767 = vmatprep.subr.mxu0 0.0
  %768 = vmatpush1.msra.mxu0 0.0
  %769 = vmatprep.subr.mxu0 0.0
  %770 = vmatpush1.msra.mxu0 0.0
  %771 = vmatprep.subr.mxu0 0.0
  %772 = vmatpush1.msra.mxu0 0.0
  %773 = vmatprep.subr.mxu0 0.0
  %774 = vmatpush1.msra.mxu0 0.0
  %775 = vmatprep.subr.mxu0 0.0
  %776 = vmatpush1.msra.mxu0 0.0
  %777 = vmatprep.subr.mxu0 0.0
  %778 = vmatpush1.msra.mxu0 0.0
  %779 = vmatprep.subr.mxu0 0.0
  %780 = vmatpush1.msra.mxu0 0.0
  %781 = vmatprep.subr.mxu0 0.0
  %782 = vmatpush1.msra.mxu0 0.0
  %783 = vmatprep.subr.mxu0 0.0
  %784 = vmatpush1.msra.mxu0 0.0
  %785 = vmatprep.mubr.f32.mxu0 0.0
  %v786 = vand.u32 %v557, 4294901760
  %v787 = vsub.f32 %v557, %v786
  %788 = vmatmul.mubr.f32.gmra.mrb[0].mxu0 %v787
  %v789 = vpop.f32.mrb[0].mxu0
  %v790 = vadd.f32 %v714, %v789
  %v791 = vpop.f32.mrb[0].mxu0
  %792 = vdwg.mxu0
  %793 = vmatprep.subr.mxu0 0.0
  %v794 = vand.u32 %v546, 4294901760
  %795 = vmatpush1.msra.mxu0 %v794
  %796 = vmatprep.subr.mxu0 0.0
  %v797 = vand.u32 %v547, 4294901760
  %798 = vmatpush1.msra.mxu0 %v797
  %799 = vmatprep.subr.mxu0 0.0
  %800 = vmatpush1.msra.mxu0 0.0
  %801 = vmatprep.subr.mxu0 0.0
  %802 = vmatpush1.msra.mxu0 0.0
  %803 = vmatprep.subr.mxu0 0.0
  %804 = vmatpush1.msra.mxu0 0.0
  %805 = vmatprep.subr.mxu0 0.0
  %806 = vmatpush1.msra.mxu0 0.0
  %807 = vmatprep.subr.mxu0 0.0
  %808 = vmatpush1.msra.mxu0 0.0
  %809 = vmatprep.subr.mxu0 0.0
  %810 = vmatpush1.msra.mxu0 0.0
  %811 = vmatprep.subr.mxu0 0.0
  %812 = vmatpush1.msra.mxu0 0.0
  %813 = vmatprep.subr.mxu0 0.0
  %814 = vmatpush1.msra.mxu0 0.0
  %815 = vmatprep.subr.mxu0 0.0
  %816 = vmatpush1.msra.mxu0 0.0
  %817 = vmatprep.subr.mxu0 0.0
  %818 = vmatpush1.msra.mxu0 0.0
  %819 = vmatprep.subr.mxu0 0.0
  %820 = vmatpush1.msra.mxu0 0.0
  %821 = vmatprep.subr.mxu0 0.0
  %822 = vmatpush1.msra.mxu0 0.0
  %823 = vmatprep.subr.mxu0 0.0
  %824 = vmatpush1.msra.mxu0 0.0
  %825 = vmatprep.subr.mxu0 0.0
  %826 = vmatpush1.msra.mxu0 0.0
  %827 = vmatprep.subr.mxu0 0.0
  %828 = vmatpush1.msra.mxu0 0.0
  %829 = vmatprep.subr.mxu0 0.0
  %830 = vmatpush1.msra.mxu0 0.0
  %831 = vmatprep.subr.mxu0 0.0
  %832 = vmatpush1.msra.mxu0 0.0
  %833 = vmatprep.subr.mxu0 0.0
  %834 = vmatpush1.msra.mxu0 0.0
  %835 = vmatprep.subr.mxu0 0.0
  %836 = vmatpush1.msra.mxu0 0.0
  %837 = vmatprep.subr.mxu0 0.0
  %838 = vmatpush1.msra.mxu0 0.0
  %839 = vmatprep.subr.mxu0 0.0
  %840 = vmatpush1.msra.mxu0 0.0
  %841 = vmatprep.subr.mxu0 0.0
  %842 = vmatpush1.msra.mxu0 0.0
  %843 = vmatprep.subr.mxu0 0.0
  %844 = vmatpush1.msra.mxu0 0.0
  %845 = vmatprep.subr.mxu0 0.0
  %846 = vmatpush1.msra.mxu0 0.0
  %847 = vmatprep.subr.mxu0 0.0
  %848 = vmatpush1.msra.mxu0 0.0
  %849 = vmatprep.subr.mxu0 0.0
  %850 = vmatpush1.msra.mxu0 0.0
  %851 = vmatprep.subr.mxu0 0.0
  %852 = vmatpush1.msra.mxu0 0.0
  %853 = vmatprep.subr.mxu0 0.0
  %854 = vmatpush1.msra.mxu0 0.0
  %855 = vmatprep.subr.mxu0 0.0
  %856 = vmatpush1.msra.mxu0 0.0
  %857 = vmatprep.subr.mxu0 0.0
  %858 = vmatpush1.msra.mxu0 0.0
  %859 = vmatprep.mubr.f32.mxu0 0.0
  %v860 = vand.u32 %v557, 4294901760
  %v861 = vsub.f32 %v557, %v860
  %v862 = vand.u32 %v861, 4294901760
  %863 = vmatmul.mubr.f32.gmra.mrb[0].mxu0 %v862
  %v864 = vpop.f32.mrb[0].mxu0
  %v865 = vadd.f32 %v790, %v864
  %v866 = vpop.f32.mrb[0].mxu0
  %867 = vdwg.mxu0
  %868 = vmatprep.subr.mxu0 0.0
  %v869 = vand.u32 %v546, 4294901760
  %v870 = vsub.f32 %v546, %v869
  %v871 = vand.u32 %v870, 4294901760
  %872 = vmatpush1.msra.mxu0 %v871
  %873 = vmatprep.subr.mxu0 0.0
  %v874 = vand.u32 %v547, 4294901760
  %v875 = vsub.f32 %v547, %v874
  %v876 = vand.u32 %v875, 4294901760
  %877 = vmatpush1.msra.mxu0 %v876
  %878 = vmatprep.subr.mxu0 0.0
  %879 = vmatpush1.msra.mxu0 0.0
  %880 = vmatprep.subr.mxu0 0.0
  %881 = vmatpush1.msra.mxu0 0.0
  %882 = vmatprep.subr.mxu0 0.0
  %883 = vmatpush1.msra.mxu0 0.0
  %884 = vmatprep.subr.mxu0 0.0
  %885 = vmatpush1.msra.mxu0 0.0
  %886 = vmatprep.subr.mxu0 0.0
  %887 = vmatpush1.msra.mxu0 0.0
  %888 = vmatprep.subr.mxu0 0.0
  %889 = vmatpush1.msra.mxu0 0.0
  %890 = vmatprep.subr.mxu0 0.0
  %891 = vmatpush1.msra.mxu0 0.0
  %892 = vmatprep.subr.mxu0 0.0
  %893 = vmatpush1.msra.mxu0 0.0
  %894 = vmatprep.subr.mxu0 0.0
  %895 = vmatpush1.msra.mxu0 0.0
  %896 = vmatprep.subr.mxu0 0.0
  %897 = vmatpush1.msra.mxu0 0.0
  %898 = vmatprep.subr.mxu0 0.0
  %899 = vmatpush1.msra.mxu0 0.0
  %900 = vmatprep.subr.mxu0 0.0
  %901 = vmatpush1.msra.mxu0 0.0
  %902 = vmatprep.subr.mxu0 0.0
  %903 = vmatpush1.msra.mxu0 0.0
  %904 = vmatprep.subr.mxu0 0.0
  %905 = vmatpush1.msra.mxu0 0.0
  %906 = vmatprep.subr.mxu0 0.0
  %907 = vmatpush1.msra.mxu0 0.0
  %908 = vmatprep.subr.mxu0 0.0
  %909 = vmatpush1.msra.mxu0 0.0
  %910 = vmatprep.subr.mxu0 0.0
  %911 = vmatpush1.msra.mxu0 0.0
  %912 = vmatprep.subr.mxu0 0.0
  %913 = vmatpush1.msra.mxu0 0.0
  %914 = vmatprep.subr.mxu0 0.0
  %915 = vmatpush1.msra.mxu0 0.0
  %916 = vmatprep.subr.mxu0 0.0
  %917 = vmatpush1.msra.mxu0 0.0
  %918 = vmatprep.subr.mxu0 0.0
  %919 = vmatpush1.msra.mxu0 0.0
  %920 = vmatprep.subr.mxu0 0.0
  %921 = vmatpush1.msra.mxu0 0.0
  %922 = vmatprep.subr.mxu0 0.0
  %923 = vmatpush1.msra.mxu0 0.0
  %924 = vmatprep.subr.mxu0 0.0
  %925 = vmatpush1.msra.mxu0 0.0
  %926 = vmatprep.subr.mxu0 0.0
  %927 = vmatpush1.msra.mxu0 0.0
  %928 = vmatprep.subr.mxu0 0.0
  %929 = vmatpush1.msra.mxu0 0.0
  %930 = vmatprep.subr.mxu0 0.0
  %931 = vmatpush1.msra.mxu0 0.0
  %932 = vmatprep.subr.mxu0 0.0
  %933 = vmatpush1.msra.mxu0 0.0
  %934 = vmatprep.subr.mxu0 0.0
  %935 = vmatpush1.msra.mxu0 0.0
  %936 = vmatprep.subr.mxu0 0.0
  %937 = vmatpush1.msra.mxu0 0.0
  %938 = vmatprep.mubr.f32.mxu0 0.0
  %v939 = vand.u32 %v557, 4294901760
  %940 = vmatmul.mubr.f32.gmra.mrb[0].mxu0 %v939
  %v941 = vpop.f32.mrb[0].mxu0
  %v942 = vadd.f32 %v865, %v941
  %v943 = vpop.f32.mrb[0].mxu0
  %944 = vdwg.mxu0
  %945 = vmatprep.subr.mxu0 0.0
  %v946 = vand.u32 %v546, 4294901760
  %947 = vmatpush1.msra.mxu0 %v946
  %948 = vmatprep.subr.mxu0 0.0
  %v949 = vand.u32 %v547, 4294901760
  %950 = vmatpush1.msra.mxu0 %v949
  %951 = vmatprep.subr.mxu0 0.0
  %952 = vmatpush1.msra.mxu0 0.0
  %953 = vmatprep.subr.mxu0 0.0
  %954 = vmatpush1.msra.mxu0 0.0
  %955 = vmatprep.subr.mxu0 0.0
  %956 = vmatpush1.msra.mxu0 0.0
  %957 = vmatprep.subr.mxu0 0.0
  %958 = vmatpush1.msra.mxu0 0.0
  %959 = vmatprep.subr.mxu0 0.0
  %960 = vmatpush1.msra.mxu0 0.0
  %961 = vmatprep.subr.mxu0 0.0
  %962 = vmatpush1.msra.mxu0 0.0
  %963 = vmatprep.subr.mxu0 0.0
  %964 = vmatpush1.msra.mxu0 0.0
  %965 = vmatprep.subr.mxu0 0.0
  %966 = vmatpush1.msra.mxu0 0.0
  %967 = vmatprep.subr.mxu0 0.0
  %968 = vmatpush1.msra.mxu0 0.0
  %969 = vmatprep.subr.mxu0 0.0
  %970 = vmatpush1.msra.mxu0 0.0
  %971 = vmatprep.subr.mxu0 0.0
  %972 = vmatpush1.msra.mxu0 0.0
  %973 = vmatprep.subr.mxu0 0.0
  %974 = vmatpush1.msra.mxu0 0.0
  %975 = vmatprep.subr.mxu0 0.0
  %976 = vmatpush1.msra.mxu0 0.0
  %977 = vmatprep.subr.mxu0 0.0
  %978 = vmatpush1.msra.mxu0 0.0
  %979 = vmatprep.subr.mxu0 0.0
  %980 = vmatpush1.msra.mxu0 0.0
  %981 = vmatprep.subr.mxu0 0.0
  %982 = vmatpush1.msra.mxu0 0.0
  %983 = vmatprep.subr.mxu0 0.0
  %984 = vmatpush1.msra.mxu0 0.0
  %985 = vmatprep.subr.mxu0 0.0
  %986 = vmatpush1.msra.mxu0 0.0
  %987 = vmatprep.subr.mxu0 0.0
  %988 = vmatpush1.msra.mxu0 0.0
  %989 = vmatprep.subr.mxu0 0.0
  %990 = vmatpush1.msra.mxu0 0.0
  %991 = vmatprep.subr.mxu0 0.0
  %992 = vmatpush1.msra.mxu0 0.0
  %993 = vmatprep.subr.mxu0 0.0
  %994 = vmatpush1.msra.mxu0 0.0
  %995 = vmatprep.subr.mxu0 0.0
  %996 = vmatpush1.msra.mxu0 0.0
  %997 = vmatprep.subr.mxu0 0.0
  %998 = vmatpush1.msra.mxu0 0.0
  %999 = vmatprep.subr.mxu0 0.0
  %1000 = vmatpush1.msra.mxu0 0.0
  %1001 = vmatprep.subr.mxu0 0.0
  %1002 = vmatpush1.msra.mxu0 0.0
  %1003 = vmatprep.subr.mxu0 0.0
  %1004 = vmatpush1.msra.mxu0 0.0
  %1005 = vmatprep.subr.mxu0 0.0
  %1006 = vmatpush1.msra.mxu0 0.0
  %1007 = vmatprep.subr.mxu0 0.0
  %1008 = vmatpush1.msra.mxu0 0.0
  %1009 = vmatprep.subr.mxu0 0.0
  %1010 = vmatpush1.msra.mxu0 0.0
  %1011 = vmatprep.mubr.f32.mxu0 0.0
  %v1012 = vand.u32 %v557, 4294901760
  %1013 = vmatmul.mubr.f32.gmra.mrb[0].mxu0 %v1012
  %v1014 = vpop.f32.mrb[0].mxu0
  %v1015 = vadd.f32 %v942, %v1014
  %v1016 = vpop.f32.mrb[0].mxu0
  %1017 = vdwg.mxu0
  %v1018 = vmax.f32 %v1015, 0.0
  %v1019 = vld [vmem:[%s5] sm:$0xff]
  %v1020 = vld [vmem:[%s6] sm:$0x1]
  %v1022 = vlaneseq
  %v1023 = vshrl.u32 %v1022, 7
  %v1024 = vsub.s32 0, %v1023
  %v1025 = vrot.slane %v1020, %v1024
  %vm1027 = vcmask 64512
  %v1029 = vsel %vm1027, %v1018, 0
  %1031 = vmatprep.subr.mxu0 0.0
  %v1032 = vand.u32 %v1019, 4294901760
  %1033 = vmatpush1.msra.mxu0 %v1032
  %1034 = vmatprep.subr.mxu0 0.0
  %1035 = vmatpush1.msra.mxu0 0.0
  %1036 = vmatprep.subr.mxu0 0.0
  %1037 = vmatpush1.msra.mxu0 0.0
  %1038 = vmatprep.subr.mxu0 0.0
  %1039 = vmatpush1.msra.mxu0 0.0
  %1040 = vmatprep.subr.mxu0 0.0
  %1041 = vmatpush1.msra.mxu0 0.0
  %1042 = vmatprep.subr.mxu0 0.0
  %1043 = vmatpush1.msra.mxu0 0.0
  %1044 = vmatprep.subr.mxu0 0.0
  %1045 = vmatpush1.msra.mxu0 0.0
  %1046 = vmatprep.subr.mxu0 0.0
  %1047 = vmatpush1.msra.mxu0 0.0
  %1048 = vmatprep.subr.mxu0 0.0
  %1049 = vmatpush1.msra.mxu0 0.0
  %1050 = vmatprep.subr.mxu0 0.0
  %1051 = vmatpush1.msra.mxu0 0.0
  %1052 = vmatprep.subr.mxu0 0.0
  %1053 = vmatpush1.msra.mxu0 0.0
  %1054 = vmatprep.subr.mxu0 0.0
  %1055 = vmatpush1.msra.mxu0 0.0
  %1056 = vmatprep.subr.mxu0 0.0
  %1057 = vmatpush1.msra.mxu0 0.0
  %1058 = vmatprep.subr.mxu0 0.0
  %1059 = vmatpush1.msra.mxu0 0.0
  %1060 = vmatprep.subr.mxu0 0.0
  %1061 = vmatpush1.msra.mxu0 0.0
  %1062 = vmatprep.subr.mxu0 0.0
  %1063 = vmatpush1.msra.mxu0 0.0
  %1064 = vmatprep.subr.mxu0 0.0
  %1065 = vmatpush1.msra.mxu0 0.0
  %1066 = vmatprep.subr.mxu0 0.0
  %1067 = vmatpush1.msra.mxu0 0.0
  %1068 = vmatprep.subr.mxu0 0.0
  %1069 = vmatpush1.msra.mxu0 0.0
  %1070 = vmatprep.subr.mxu0 0.0
  %1071 = vmatpush1.msra.mxu0 0.0
  %1072 = vmatprep.subr.mxu0 0.0
  %1073 = vmatpush1.msra.mxu0 0.0
  %1074 = vmatprep.subr.mxu0 0.0
  %1075 = vmatpush1.msra.mxu0 0.0
  %1076 = vmatprep.subr.mxu0 0.0
  %1077 = vmatpush1.msra.mxu0 0.0
  %1078 = vmatprep.subr.mxu0 0.0
  %1079 = vmatpush1.msra.mxu0 0.0
  %1080 = vmatprep.subr.mxu0 0.0
  %1081 = vmatpush1.msra.mxu0 0.0
  %1082 = vmatprep.subr.mxu0 0.0
  %1083 = vmatpush1.msra.mxu0 0.0
  %1084 = vmatprep.subr.mxu0 0.0
  %1085 = vmatpush1.msra.mxu0 0.0
  %1086 = vmatprep.subr.mxu0 0.0
  %1087 = vmatpush1.msra.mxu0 0.0
  %1088 = vmatprep.subr.mxu0 0.0
  %1089 = vmatpush1.msra.mxu0 0.0
  %1090 = vmatprep.subr.mxu0 0.0
  %1091 = vmatpush1.msra.mxu0 0.0
  %1092 = vmatprep.subr.mxu0 0.0
  %1093 = vmatpush1.msra.mxu0 0.0
  %1094 = vmatprep.subr.mxu0 0.0
  %1095 = vmatpush1.msra.mxu0 0.0
  %1096 = vmatprep.mubr.f32.mxu0 0.0
  %v1097 = vand.u32 %v1029, 4294901760
  %v1098 = vsub.f32 %v1029, %v1097
  %v1099 = vand.u32 %v1098, 4294901760
  %v1100 = vsub.f32 %v1098, %v1099
  %v1101 = vand.u32 %v1100, 4294901760
  %1102 = vmatmul.mubr.f32.gmra.mrb[0].mxu0 %v1101
  %v1103 = vpop.f32.mrb[0].mxu0
  %v1104 = vadd.f32 %v1025, %v1103
  %v1105 = vpop.f32.mrb[0].mxu0
  %1106 = vdwg.mxu0
  %1107 = vmatprep.subr.mxu0 0.0
  %v1108 = vand.u32 %v1019, 4294901760
  %v1109 = vsub.f32 %v1019, %v1108
  %v1110 = vand.u32 %v1109, 4294901760
  %v1111 = vsub.f32 %v1109, %v1110
  %v1112 = vand.u32 %v1111, 4294901760
  %1113 = vmatpush1.msra.mxu0 %v1112
  %1114 = vmatprep.subr.mxu0 0.0
  %1115 = vmatpush1.msra.mxu0 0.0
  %1116 = vmatprep.subr.mxu0 0.0
  %1117 = vmatpush1.msra.mxu0 0.0
  %1118 = vmatprep.subr.mxu0 0.0
  %1119 = vmatpush1.msra.mxu0 0.0
  %1120 = vmatprep.subr.mxu0 0.0
  %1121 = vmatpush1.msra.mxu0 0.0
  %1122 = vmatprep.subr.mxu0 0.0
  %1123 = vmatpush1.msra.mxu0 0.0
  %1124 = vmatprep.subr.mxu0 0.0
  %1125 = vmatpush1.msra.mxu0 0.0
  %1126 = vmatprep.subr.mxu0 0.0
  %1127 = vmatpush1.msra.mxu0 0.0
  %1128 = vmatprep.subr.mxu0 0.0
  %1129 = vmatpush1.msra.mxu0 0.0
  %1130 = vmatprep.subr.mxu0 0.0
  %1131 = vmatpush1.msra.mxu0 0.0
  %1132 = vmatprep.subr.mxu0 0.0
  %1133 = vmatpush1.msra.mxu0 0.0
  %1134 = vmatprep.subr.mxu0 0.0
  %1135 = vmatpush1.msra.mxu0 0.0
  %1136 = vmatprep.subr.mxu0 0.0
  %1137 = vmatpush1.msra.mxu0 0.0
  %1138 = vmatprep.subr.mxu0 0.0
  %1139 = vmatpush1.msra.mxu0 0.0
  %1140 = vmatprep.subr.mxu0 0.0
  %1141 = vmatpush1.msra.mxu0 0.0
  %1142 = vmatprep.subr.mxu0 0.0
  %1143 = vmatpush1.msra.mxu0 0.0
  %1144 = vmatprep.subr.mxu0 0.0
  %1145 = vmatpush1.msra.mxu0 0.0
  %1146 = vmatprep.subr.mxu0 0.0
  %1147 = vmatpush1.msra.mxu0 0.0
  %1148 = vmatprep.subr.mxu0 0.0
  %1149 = vmatpush1.msra.mxu0 0.0
  %1150 = vmatprep.subr.mxu0 0.0
  %1151 = vmatpush1.msra.mxu0 0.0
  %1152 = vmatprep.subr.mxu0 0.0
  %1153 = vmatpush1.msra.mxu0 0.0
  %1154 = vmatprep.subr.mxu0 0.0
  %1155 = vmatpush1.msra.mxu0 0.0
  %1156 = vmatprep.subr.mxu0 0.0
  %1157 = vmatpush1.msra.mxu0 0.0
  %1158 = vmatprep.subr.mxu0 0.0
  %1159 = vmatpush1.msra.mxu0 0.0
  %1160 = vmatprep.subr.mxu0 0.0
  %1161 = vmatpush1.msra.mxu0 0.0
  %1162 = vmatprep.subr.mxu0 0.0
  %1163 = vmatpush1.msra.mxu0 0.0
  %1164 = vmatprep.subr.mxu0 0.0
  %1165 = vmatpush1.msra.mxu0 0.0
  %1166 = vmatprep.subr.mxu0 0.0
  %1167 = vmatpush1.msra.mxu0 0.0
  %1168 = vmatprep.subr.mxu0 0.0
  %1169 = vmatpush1.msra.mxu0 0.0
  %1170 = vmatprep.subr.mxu0 0.0
  %1171 = vmatpush1.msra.mxu0 0.0
  %1172 = vmatprep.subr.mxu0 0.0
  %1173 = vmatpush1.msra.mxu0 0.0
  %1174 = vmatprep.subr.mxu0 0.0
  %1175 = vmatpush1.msra.mxu0 0.0
  %1176 = vmatprep.mubr.f32.mxu0 0.0
  %v1177 = vand.u32 %v1029, 4294901760
  %1178 = vmatmul.mubr.f32.gmra.mrb[0].mxu0 %v1177
  %v1179 = vpop.f32.mrb[0].mxu0
  %v1180 = vadd.f32 %v1104, %v1179
  %v1181 = vpop.f32.mrb[0].mxu0
  %1182 = vdwg.mxu0
  %1183 = vmatprep.subr.mxu0 0.0
  %v1184 = vand.u32 %v1019, 4294901760
  %v1185 = vsub.f32 %v1019, %v1184
  %1186 = vmatpush1.msra.mxu0 %v1185
  %1187 = vmatprep.subr.mxu0 0.0
  %1188 = vmatpush1.msra.mxu0 0.0
  %1189 = vmatprep.subr.mxu0 0.0
  %1190 = vmatpush1.msra.mxu0 0.0
  %1191 = vmatprep.subr.mxu0 0.0
  %1192 = vmatpush1.msra.mxu0 0.0
  %1193 = vmatprep.subr.mxu0 0.0
  %1194 = vmatpush1.msra.mxu0 0.0
  %1195 = vmatprep.subr.mxu0 0.0
  %1196 = vmatpush1.msra.mxu0 0.0
  %1197 = vmatprep.subr.mxu0 0.0
  %1198 = vmatpush1.msra.mxu0 0.0
  %1199 = vmatprep.subr.mxu0 0.0
  %1200 = vmatpush1.msra.mxu0 0.0
  %1201 = vmatprep.subr.mxu0 0.0
  %1202 = vmatpush1.msra.mxu0 0.0
  %1203 = vmatprep.subr.mxu0 0.0
  %1204 = vmatpush1.msra.mxu0 0.0
  %1205 = vmatprep.subr.mxu0 0.0
  %1206 = vmatpush1.msra.mxu0 0.0
  %1207 = vmatprep.subr.mxu0 0.0
  %1208 = vmatpush1.msra.mxu0 0.0
  %1209 = vmatprep.subr.mxu0 0.0
  %1210 = vmatpush1.msra.mxu0 0.0
  %1211 = vmatprep.subr.mxu0 0.0
  %1212 = vmatpush1.msra.mxu0 0.0
  %1213 = vmatprep.subr.mxu0 0.0
  %1214 = vmatpush1.msra.mxu0 0.0
  %1215 = vmatprep.subr.mxu0 0.0
  %1216 = vmatpush1.msra.mxu0 0.0
  %1217 = vmatprep.subr.mxu0 0.0
  %1218 = vmatpush1.msra.mxu0 0.0
  %1219 = vmatprep.subr.mxu0 0.0
  %1220 = vmatpush1.msra.mxu0 0.0
  %1221 = vmatprep.subr.mxu0 0.0
  %1222 = vmatpush1.msra.mxu0 0.0
  %1223 = vmatprep.subr.mxu0 0.0
  %1224 = vmatpush1.msra.mxu0 0.0
  %1225 = vmatprep.subr.mxu0 0.0
  %1226 = vmatpush1.msra.mxu0 0.0
  %1227 = vmatprep.subr.mxu0 0.0
  %1228 = vmatpush1.msra.mxu0 0.0
  %1229 = vmatprep.subr.mxu0 0.0
  %1230 = vmatpush1.msra.mxu0 0.0
  %1231 = vmatprep.subr.mxu0 0.0
  %1232 = vmatpush1.msra.mxu0 0.0
  %1233 = vmatprep.subr.mxu0 0.0
  %1234 = vmatpush1.msra.mxu0 0.0
  %1235 = vmatprep.subr.mxu0 0.0
  %1236 = vmatpush1.msra.mxu0 0.0
  %1237 = vmatprep.subr.mxu0 0.0
  %1238 = vmatpush1.msra.mxu0 0.0
  %1239 = vmatprep.subr.mxu0 0.0
  %1240 = vmatpush1.msra.mxu0 0.0
  %1241 = vmatprep.subr.mxu0 0.0
  %1242 = vmatpush1.msra.mxu0 0.0
  %1243 = vmatprep.subr.mxu0 0.0
  %1244 = vmatpush1.msra.mxu0 0.0
  %1245 = vmatprep.subr.mxu0 0.0
  %1246 = vmatpush1.msra.mxu0 0.0
  %1247 = vmatprep.subr.mxu0 0.0
  %1248 = vmatpush1.msra.mxu0 0.0
  %1249 = vmatprep.mubr.f32.mxu0 0.0
  %v1250 = vand.u32 %v1029, 4294901760
  %v1251 = vsub.f32 %v1029, %v1250
  %1252 = vmatmul.mubr.f32.gmra.mrb[0].mxu0 %v1251
  %v1253 = vpop.f32.mrb[0].mxu0
  %v1254 = vadd.f32 %v1180, %v1253
  %v1255 = vpop.f32.mrb[0].mxu0
  %1256 = vdwg.mxu0
  %1257 = vmatprep.subr.mxu0 0.0
  %v1258 = vand.u32 %v1019, 4294901760
  %1259 = vmatpush1.msra.mxu0 %v1258
  %1260 = vmatprep.subr.mxu0 0.0
  %1261 = vmatpush1.msra.mxu0 0.0
  %1262 = vmatprep.subr.mxu0 0.0
  %1263 = vmatpush1.msra.mxu0 0.0
  %1264 = vmatprep.subr.mxu0 0.0
  %1265 = vmatpush1.msra.mxu0 0.0
  %1266 = vmatprep.subr.mxu0 0.0
  %1267 = vmatpush1.msra.mxu0 0.0
  %1268 = vmatprep.subr.mxu0 0.0
  %1269 = vmatpush1.msra.mxu0 0.0
  %1270 = vmatprep.subr.mxu0 0.0
  %1271 = vmatpush1.msra.mxu0 0.0
  %1272 = vmatprep.subr.mxu0 0.0
  %1273 = vmatpush1.msra.mxu0 0.0
  %1274 = vmatprep.subr.mxu0 0.0
  %1275 = vmatpush1.msra.mxu0 0.0
  %1276 = vmatprep.subr.mxu0 0.0
  %1277 = vmatpush1.msra.mxu0 0.0
  %1278 = vmatprep.subr.mxu0 0.0
  %1279 = vmatpush1.msra.mxu0 0.0
  %1280 = vmatprep.subr.mxu0 0.0
  %1281 = vmatpush1.msra.mxu0 0.0
  %1282 = vmatprep.subr.mxu0 0.0
  %1283 = vmatpush1.msra.mxu0 0.0
  %1284 = vmatprep.subr.mxu0 0.0
  %1285 = vmatpush1.msra.mxu0 0.0
  %1286 = vmatprep.subr.mxu0 0.0
  %1287 = vmatpush1.msra.mxu0 0.0
  %1288 = vmatprep.subr.mxu0 0.0
  %1289 = vmatpush1.msra.mxu0 0.0
  %1290 = vmatprep.subr.mxu0 0.0
  %1291 = vmatpush1.msra.mxu0 0.0
  %1292 = vmatprep.subr.mxu0 0.0
  %1293 = vmatpush1.msra.mxu0 0.0
  %1294 = vmatprep.subr.mxu0 0.0
  %1295 = vmatpush1.msra.mxu0 0.0
  %1296 = vmatprep.subr.mxu0 0.0
  %1297 = vmatpush1.msra.mxu0 0.0
  %1298 = vmatprep.subr.mxu0 0.0
  %1299 = vmatpush1.msra.mxu0 0.0
  %1300 = vmatprep.subr.mxu0 0.0
  %1301 = vmatpush1.msra.mxu0 0.0
  %1302 = vmatprep.subr.mxu0 0.0
  %1303 = vmatpush1.msra.mxu0 0.0
  %1304 = vmatprep.subr.mxu0 0.0
  %1305 = vmatpush1.msra.mxu0 0.0
  %1306 = vmatprep.subr.mxu0 0.0
  %1307 = vmatpush1.msra.mxu0 0.0
  %1308 = vmatprep.subr.mxu0 0.0
  %1309 = vmatpush1.msra.mxu0 0.0
  %1310 = vmatprep.subr.mxu0 0.0
  %1311 = vmatpush1.msra.mxu0 0.0
  %1312 = vmatprep.subr.mxu0 0.0
  %1313 = vmatpush1.msra.mxu0 0.0
  %1314 = vmatprep.subr.mxu0 0.0
  %1315 = vmatpush1.msra.mxu0 0.0
  %1316 = vmatprep.subr.mxu0 0.0
  %1317 = vmatpush1.msra.mxu0 0.0
  %1318 = vmatprep.subr.mxu0 0.0
  %1319 = vmatpush1.msra.mxu0 0.0
  %1320 = vmatprep.subr.mxu0 0.0
  %1321 = vmatpush1.msra.mxu0 0.0
  %1322 = vmatprep.mubr.f32.mxu0 0.0
  %v1323 = vand.u32 %v1029, 4294901760
  %v1324 = vsub.f32 %v1029, %v1323
  %v1325 = vand.u32 %v1324, 4294901760
  %1326 = vmatmul.mubr.f32.gmra.mrb[0].mxu0 %v1325
  %v1327 = vpop.f32.mrb[0].mxu0
  %v1328 = vadd.f32 %v1254, %v1327
  %v1329 = vpop.f32.mrb[0].mxu0
  %1330 = vdwg.mxu0
  %1331 = vmatprep.subr.mxu0 0.0
  %v1332 = vand.u32 %v1019, 4294901760
  %v1333 = vsub.f32 %v1019, %v1332
  %v1334 = vand.u32 %v1333, 4294901760
  %1335 = vmatpush1.msra.mxu0 %v1334
  %1336 = vmatprep.subr.mxu0 0.0
  %1337 = vmatpush1.msra.mxu0 0.0
  %1338 = vmatprep.subr.mxu0 0.0
  %1339 = vmatpush1.msra.mxu0 0.0
  %1340 = vmatprep.subr.mxu0 0.0
  %1341 = vmatpush1.msra.mxu0 0.0
  %1342 = vmatprep.subr.mxu0 0.0
  %1343 = vmatpush1.msra.mxu0 0.0
  %1344 = vmatprep.subr.mxu0 0.0
  %1345 = vmatpush1.msra.mxu0 0.0
  %1346 = vmatprep.subr.mxu0 0.0
  %1347 = vmatpush1.msra.mxu0 0.0
  %1348 = vmatprep.subr.mxu0 0.0
  %1349 = vmatpush1.msra.mxu0 0.0
  %1350 = vmatprep.subr.mxu0 0.0
  %1351 = vmatpush1.msra.mxu0 0.0
  %1352 = vmatprep.subr.mxu0 0.0
  %1353 = vmatpush1.msra.mxu0 0.0
  %1354 = vmatprep.subr.mxu0 0.0
  %1355 = vmatpush1.msra.mxu0 0.0
  %1356 = vmatprep.subr.mxu0 0.0
  %1357 = vmatpush1.msra.mxu0 0.0
  %1358 = vmatprep.subr.mxu0 0.0
  %1359 = vmatpush1.msra.mxu0 0.0
  %1360 = vmatprep.subr.mxu0 0.0
  %1361 = vmatpush1.msra.mxu0 0.0
  %1362 = vmatprep.subr.mxu0 0.0
  %1363 = vmatpush1.msra.mxu0 0.0
  %1364 = vmatprep.subr.mxu0 0.0
  %1365 = vmatpush1.msra.mxu0 0.0
  %1366 = vmatprep.subr.mxu0 0.0
  %1367 = vmatpush1.msra.mxu0 0.0
  %1368 = vmatprep.subr.mxu0 0.0
  %1369 = vmatpush1.msra.mxu0 0.0
  %1370 = vmatprep.subr.mxu0 0.0
  %1371 = vmatpush1.msra.mxu0 0.0
  %1372 = vmatprep.subr.mxu0 0.0
  %1373 = vmatpush1.msra.mxu0 0.0
  %1374 = vmatprep.subr.mxu0 0.0
  %1375 = vmatpush1.msra.mxu0 0.0
  %1376 = vmatprep.subr.mxu0 0.0
  %1377 = vmatpush1.msra.mxu0 0.0
  %1378 = vmatprep.subr.mxu0 0.0
  %1379 = vmatpush1.msra.mxu0 0.0
  %1380 = vmatprep.subr.mxu0 0.0
  %1381 = vmatpush1.msra.mxu0 0.0
  %1382 = vmatprep.subr.mxu0 0.0
  %1383 = vmatpush1.msra.mxu0 0.0
  %1384 = vmatprep.subr.mxu0 0.0
  %1385 = vmatpush1.msra.mxu0 0.0
  %1386 = vmatprep.subr.mxu0 0.0
  %1387 = vmatpush1.msra.mxu0 0.0
  %1388 = vmatprep.subr.mxu0 0.0
  %1389 = vmatpush1.msra.mxu0 0.0
  %1390 = vmatprep.subr.mxu0 0.0
  %1391 = vmatpush1.msra.mxu0 0.0
  %1392 = vmatprep.subr.mxu0 0.0
  %1393 = vmatpush1.msra.mxu0 0.0
  %1394 = vmatprep.subr.mxu0 0.0
  %1395 = vmatpush1.msra.mxu0 0.0
  %1396 = vmatprep.subr.mxu0 0.0
  %1397 = vmatpush1.msra.mxu0 0.0
  %1398 = vmatprep.mubr.f32.mxu0 0.0
  %v1399 = vand.u32 %v1029, 4294901760
  %1400 = vmatmul.mubr.f32.gmra.mrb[0].mxu0 %v1399
  %v1401 = vpop.f32.mrb[0].mxu0
  %v1402 = vadd.f32 %v1328, %v1401
  %v1403 = vpop.f32.mrb[0].mxu0
  %1404 = vdwg.mxu0
  %1405 = vmatprep.subr.mxu0 0.0
  %v1406 = vand.u32 %v1019, 4294901760
  %1407 = vmatpush1.msra.mxu0 %v1406
  %1408 = vmatprep.subr.mxu0 0.0
  %1409 = vmatpush1.msra.mxu0 0.0
  %1410 = vmatprep.subr.mxu0 0.0
  %1411 = vmatpush1.msra.mxu0 0.0
  %1412 = vmatprep.subr.mxu0 0.0
  %1413 = vmatpush1.msra.mxu0 0.0
  %1414 = vmatprep.subr.mxu0 0.0
  %1415 = vmatpush1.msra.mxu0 0.0
  %1416 = vmatprep.subr.mxu0 0.0
  %1417 = vmatpush1.msra.mxu0 0.0
  %1418 = vmatprep.subr.mxu0 0.0
  %1419 = vmatpush1.msra.mxu0 0.0
  %1420 = vmatprep.subr.mxu0 0.0
  %1421 = vmatpush1.msra.mxu0 0.0
  %1422 = vmatprep.subr.mxu0 0.0
  %1423 = vmatpush1.msra.mxu0 0.0
  %1424 = vmatprep.subr.mxu0 0.0
  %1425 = vmatpush1.msra.mxu0 0.0
  %1426 = vmatprep.subr.mxu0 0.0
  %1427 = vmatpush1.msra.mxu0 0.0
  %1428 = vmatprep.subr.mxu0 0.0
  %1429 = vmatpush1.msra.mxu0 0.0
  %1430 = vmatprep.subr.mxu0 0.0
  %1431 = vmatpush1.msra.mxu0 0.0
  %1432 = vmatprep.subr.mxu0 0.0
  %1433 = vmatpush1.msra.mxu0 0.0
  %1434 = vmatprep.subr.mxu0 0.0
  %1435 = vmatpush1.msra.mxu0 0.0
  %1436 = vmatprep.subr.mxu0 0.0
  %1437 = vmatpush1.msra.mxu0 0.0
  %1438 = vmatprep.subr.mxu0 0.0
  %1439 = vmatpush1.msra.mxu0 0.0
  %1440 = vmatprep.subr.mxu0 0.0
  %1441 = vmatpush1.msra.mxu0 0.0
  %1442 = vmatprep.subr.mxu0 0.0
  %1443 = vmatpush1.msra.mxu0 0.0
  %1444 = vmatprep.subr.mxu0 0.0
  %1445 = vmatpush1.msra.mxu0 0.0
  %1446 = vmatprep.subr.mxu0 0.0
  %1447 = vmatpush1.msra.mxu0 0.0
  %1448 = vmatprep.subr.mxu0 0.0
  %1449 = vmatpush1.msra.mxu0 0.0
  %1450 = vmatprep.subr.mxu0 0.0
  %1451 = vmatpush1.msra.mxu0 0.0
  %1452 = vmatprep.subr.mxu0 0.0
  %1453 = vmatpush1.msra.mxu0 0.0
  %1454 = vmatprep.subr.mxu0 0.0
  %1455 = vmatpush1.msra.mxu0 0.0
  %1456 = vmatprep.subr.mxu0 0.0
  %1457 = vmatpush1.msra.mxu0 0.0
  %1458 = vmatprep.subr.mxu0 0.0
  %1459 = vmatpush1.msra.mxu0 0.0
  %1460 = vmatprep.subr.mxu0 0.0
  %1461 = vmatpush1.msra.mxu0 0.0
  %1462 = vmatprep.subr.mxu0 0.0
  %1463 = vmatpush1.msra.mxu0 0.0
  %1464 = vmatprep.subr.mxu0 0.0
  %1465 = vmatpush1.msra.mxu0 0.0
  %1466 = vmatprep.subr.mxu0 0.0
  %1467 = vmatpush1.msra.mxu0 0.0
  %1468 = vmatprep.subr.mxu0 0.0
  %1469 = vmatpush1.msra.mxu0 0.0
  %1470 = vmatprep.mubr.f32.mxu0 0.0
  %v1471 = vand.u32 %v1029, 4294901760
  %1472 = vmatmul.mubr.f32.gmra.mrb[0].mxu0 %v1471
  %v1473 = vpop.f32.mrb[0].mxu0
  %v1474 = vadd.f32 %v1402, %v1473
  %v1475 = vpop.f32.mrb[0].mxu0
  %1476 = vdwg.mxu0
  %1478 = vset.pattern.permute.xlu0 4
  %1479 = vperm.xlu0 %1478, %v1474
  %v1480 = vpop.permute.xlu0 %1479
  %v1482 = vadd.f32 %v1474, %v1480
  %vm1483 = vcmask 31744
  %v1484 = vsel %vm1483, %v1474, 0.0
  %1485 = vadd.xlane.f32.xlu0 %v1484
  %v1486 = vpop.xlane.xlu0 %1485
  %v1487 = vrcp.pop 4.0
  %v1488 = vmul.f32 %v1486, %v1487
  %v1489 = vsub.f32 %v1482, %v1488
  %1490 = vst.msk [vmem:[%s7] sm:$0xff] %vm1483, %v1489
  // Predicated region
  $region30: #{tpu_custom_call.1} parent=0 // pred_check
    _
  $region31: #{tpu_custom_call.1} parent=0 // pred_check_branch
    %1492 = sbr.rel (0) target = $region33
  $region32: #{tpu_custom_call.1} parent=0 // pred_region
    _
  $region33: #{tpu_custom_call.1} parent=0 // pred_fallthru
    _
  // Predicated region
  $region34: #{tpu_custom_call.1} parent=0 // pred_check
    _
  $region35: #{tpu_custom_call.1} parent=0 // pred_check_branch
    %1494 = sbr.rel (0) target = $region37
  $region36: #{tpu_custom_call.1} parent=0 // pred_region
    _
  $region37: #{tpu_custom_call.1} parent=0 // pred_fallthru
    _

</llo_original>
